<compile_context>
chip_gen: v6e
topology: v6e:2x2x1
jax: 0.10.0
libtpu: 0.0.40
codegen_flags: <defaults>
</compile_context>

<pallas_src>
import jax
import jax.numpy as jnp
import numpy as np
from jax.experimental import pallas as pl
from jax.experimental.pallas import tpu as pltpu


# -----------------------------------------------------------------------------
# Pallas kernel: whole LSTM recurrence in one invocation
# -----------------------------------------------------------------------------
def lstm_kernel(x_ref, wih_ref, whh_ref, b_ref, out_ref, xproj_ref):
    # x_ref     : (seq*B, D)      bf16 flattened time-major input
    # wih_ref   : (D, 4*Hp)       bf16 W_ih^T, gate order [i,f,o,g], col-padded
    # whh_ref   : (Hp, 4*Hp)      bf16 W_hh^T, row- and col-padded
    # b_ref     : (1, 4*Hp)       f32  (b_ih + b_hh), reordered + padded
    # out_ref   : (1, B, Hp)      f32  lane-dense final hidden state
    # xproj_ref : (seq*B, 4*Hp)   f32  VMEM scratch for the hoisted projection
    batch = out_ref.shape[1]
    Hp = out_ref.shape[2]
    seq = x_ref.shape[0] // batch

    # Hoisted, non-recurrent input projection for ALL timesteps (one MXU pass,
    # bf16 operands, f32 accumulate) with the bias folded in so the serial
    # loop never touches it.
    xproj_ref[...] = (
        jnp.dot(x_ref[...], wih_ref[...], preferred_element_type=jnp.float32)
        + b_ref[...]
    )

    h0 = jnp.zeros((batch, Hp), jnp.float32)
    c0 = jnp.zeros((batch, Hp), jnp.float32)

    def step(t, carry):
        h, c = carry
        row = pl.multiple_of(t * batch, batch)
        gates = (
            jnp.dot(h.astype(jnp.bfloat16), whh_ref[...],
                    preferred_element_type=jnp.float32)
            + xproj_ref[pl.ds(row, batch), :]
        )  # (B, 4*Hp) f32

        # Gate order [i, f, o, g]: sigmoids in one contiguous op, tanh in one.
        sig = jax.nn.sigmoid(gates[:, 0:3 * Hp])
        g_g = jnp.tanh(gates[:, 3 * Hp:4 * Hp])
        i_g = sig[:, 0 * Hp:1 * Hp]
        f_g = sig[:, 1 * Hp:2 * Hp]
        o_g = sig[:, 2 * Hp:3 * Hp]

        c_new = f_g * c + i_g * g_g
        h_new = o_g * jnp.tanh(c_new)
        return (h_new, c_new)

    # Bounded unroll: insurance against long obs_len (vreg live ranges).
    h_final, _ = jax.lax.fori_loop(0, seq, step, (h0, c0),
                                   unroll=min(int(seq), 8))

    # Single, lane-dense (Hp = multiple of 128) unmasked store.
    out_ref[0] = h_final.astype(out_ref.dtype)


def lstm_final_h(x, w_ih_pad, w_hh_pad, bias_pad, h_dim):
    """x: (seq, B, D) f32. Returns final hidden state (1, B, h_dim) f32."""
    seq, B, D = x.shape
    Hp = w_hh_pad.shape[0]
    assert w_ih_pad.shape == (D, 4 * Hp)
    assert w_hh_pad.shape == (Hp, 4 * Hp)
    assert bias_pad.shape == (1, 4 * Hp)
    assert Hp % 128 == 0 and Hp >= h_dim

    # Pad batch to a multiple of 8 sublanes (padded rows are inert, dropped).
    Bp = ((B + 7) // 8) * 8
    if Bp != B:
        x = jnp.pad(x, ((0, 0), (0, Bp - B), (0, 0)))

    # Pure view: (seq, Bp, D) -> (seq*Bp, D); cast to bf16 for the MXU.
    x_flat = x.reshape(seq * Bp, D).astype(jnp.bfloat16)

    # Explicit scoped-VMEM budget: inputs + xproj scratch + output + headroom.
    vmem_bytes = (
        x_flat.size * 2
        + w_ih_pad.size * 2 + w_hh_pad.size * 2 + bias_pad.size * 4
        + seq * Bp * 4 * Hp * 4          # xproj scratch (f32)
        + Bp * Hp * 4                    # output
    )
    vmem_limit = min(max(2 * int(vmem_bytes) + (4 << 20), 16 << 20), 64 << 20)

    out = pl.pallas_call(
        lstm_kernel,
        out_shape=jax.ShapeDtypeStruct((1, Bp, Hp), jnp.float32),
        in_specs=[
            pl.BlockSpec(memory_space=pltpu.MemorySpace.VMEM),  # x (seq*Bp, D)
            pl.BlockSpec(memory_space=pltpu.MemorySpace.VMEM),  # W_ih^T padded
            pl.BlockSpec(memory_space=pltpu.MemorySpace.VMEM),  # W_hh^T padded
            pl.BlockSpec(memory_space=pltpu.MemorySpace.VMEM),  # bias padded
        ],
        out_specs=pl.BlockSpec(memory_space=pltpu.MemorySpace.VMEM),
        scratch_shapes=[
            pltpu.VMEM((seq * Bp, 4 * Hp), jnp.float32),  # hoisted x-projection
        ],
        compiler_params=pltpu.CompilerParams(vmem_limit_bytes=vmem_limit),
    )(x_flat, w_ih_pad, w_hh_pad, bias_pad)

    # Trim padded batch rows and padded hidden lanes OUTSIDE the kernel
    # (keeps the in-kernel store lane-dense / unmasked).
    return out[:, :B, :h_dim]


# -----------------------------------------------------------------------------
# Parameter preparation (reorder/pad/cast done once, outside the kernel)
# -----------------------------------------------------------------------------
def pad_lstm_params(w_ih, w_hh, b_ih, b_hh):
    """PyTorch-layout LSTM params -> lane-aligned, gate-reordered bf16 params."""
    fourH, D = w_ih.shape
    H = fourH // 4
    Hp = ((H + 127) // 128) * 128  # pad hidden to a multiple of 128 lanes

    def reorder_and_pad(m):
        # PyTorch gate order is (i, f, g, o); kernel wants (i, f, o, g) so the
        # three sigmoid gates are contiguous. Each gate is zero-padded H -> Hp.
        i, f, g, o = jnp.split(m, 4, axis=-1)
        pad_width = [(0, 0)] * (m.ndim - 1) + [(0, Hp - H)]
        return jnp.concatenate(
            [jnp.pad(p, pad_width) for p in (i, f, o, g)], axis=-1)

    w_ih_pad = reorder_and_pad(w_ih.T).astype(jnp.bfloat16)          # (D, 4Hp)
    w_hh_pad = reorder_and_pad(w_hh.T)                               # (H, 4Hp)
    w_hh_pad = jnp.pad(w_hh_pad, ((0, Hp - H), (0, 0))).astype(jnp.bfloat16)
    bias_pad = reorder_and_pad((b_ih + b_hh)[None, :]).astype(jnp.float32)
    return w_ih_pad, w_hh_pad, bias_pad


def encoder_forward(obs_data, params, embedding_dim, h_dim):
    """obs_data: (obs_len, batch, joints) with joints == embedding_dim."""
    batch = obs_data.shape[1]
    # The reshapes only preserve semantics if joints == embedding_dim.
    assert obs_data.shape[2] == embedding_dim, "joints must equal embedding_dim"
    # Reproduce the .view() chain from the PyTorch forward (pure reshape;
    # spatial_embedding is never applied in the reference forward).
    obs_embedding = obs_data.reshape(-1, obs_data.shape[2])
    obs_embedding = obs_embedding.reshape(-1, batch, embedding_dim)

    final_h = lstm_final_h(
        obs_embedding,
        params["w_ih_pad"],
        params["w_hh_pad"],
        params["bias_pad"],
        h_dim,
    )
    return final_h  # (num_layers=1, batch, h_dim)


def make_params(key, embedding_dim, h_dim):
    """Deterministic synthetic LSTM params (PyTorch-style uniform init)."""
    k1, k2, k3, k4 = jax.random.split(key, 4)
    bound = 1.0 / np.sqrt(h_dim)
    w_ih = jax.random.uniform(k1, (4 * h_dim, embedding_dim), jnp.float32, -bound, bound)
    w_hh = jax.random.uniform(k2, (4 * h_dim, h_dim), jnp.float32, -bound, bound)
    b_ih = jax.random.uniform(k3, (4 * h_dim,), jnp.float32, -bound, bound)
    b_hh = jax.random.uniform(k4, (4 * h_dim,), jnp.float32, -bound, bound)
    w_ih_pad, w_hh_pad, bias_pad = pad_lstm_params(w_ih, w_hh, b_ih, b_hh)
    return {
        "w_ih": w_ih, "w_hh": w_hh, "b_ih": b_ih, "b_hh": b_hh,
        "w_ih_pad": w_ih_pad, "w_hh_pad": w_hh_pad, "bias_pad": bias_pad,
    }


def reference_lstm_final_h(x, w_ih, w_hh, b_ih, b_hh):
    """Pure-JAX f32 reference matching torch.nn.LSTM, for verification."""
    H = w_hh.shape[1]
    B = x.shape[1]

    def step(carry, x_t):
        h, c = carry
        gates = x_t @ w_ih.T + h @ w_hh.T + b_ih + b_hh
        i = jax.nn.sigmoid(gates[:, 0 * H:1 * H])
        f = jax.nn.sigmoid(gates[:, 1 * H:2 * H])
        g = jnp.tanh(gates[:, 2 * H:3 * H])
        o = jax.nn.sigmoid(gates[:, 3 * H:4 * H])
        c = f * c + i * g
        h = o * jnp.tanh(c)
        return (h, c), None

    h0 = jnp.zeros((B, H), jnp.float32)
    (h, _), _ = jax.lax.scan(step, (h0, h0), x)
    return h[None]


if __name__ == "__main__":
    # Small shapes consistent with the module's forward:
    #   obs_len=8, batch=8, joints == embedding_dim = 64, h_dim = 64
    obs_len, batch = 8, 8
    embedding_dim, h_dim = 64, 64

    key = jax.random.PRNGKey(0)
    k_x, k_p = jax.random.split(key)
    obs_data = jax.random.normal(k_x, (obs_len, batch, embedding_dim), jnp.float32)
    params = make_params(k_p, embedding_dim, h_dim)

    final_h = encoder_forward(obs_data, params, embedding_dim, h_dim)
    final_h = jax.block_until_ready(final_h)

    ref = reference_lstm_final_h(
        obs_data, params["w_ih"], params["w_hh"], params["b_ih"], params["b_hh"]
    )
    ref = jax.block_until_ready(ref)

    assert final_h.shape == (1, batch, h_dim), final_h.shape
    # Relaxed tolerance: kernel uses bf16 MXU operands with f32 accumulation.
    np.testing.assert_allclose(np.asarray(final_h), np.asarray(ref),
                               atol=2e-2, rtol=2e-2)

    # TODO(synk): self.spatial_embedding (nn.Linear(Inp_size=0, embedding_dim))
    # is defined in __init__ but never used in forward(), so it is not modeled.
    print("KERNEL_OK")
</pallas_src>

<mosaic_0001>
module attributes {stable_mosaic.version = 11 : i64} {
  func.func @lstm_kernel(%arg0: memref<64x64xbf16, #tpu.memory_space<vmem>>, %arg1: memref<64x512xbf16, #tpu.memory_space<vmem>>, %arg2: memref<128x512xbf16, #tpu.memory_space<vmem>>, %arg3: memref<1x512xf32, #tpu.memory_space<vmem>>, %arg4: memref<1x8x128xf32, #tpu.memory_space<vmem>>, %arg5: memref<64x512xf32, #tpu.memory_space<vmem>>) attributes {dimension_semantics = [], scalar_prefetch = 0 : i64, scratch_operands = 1 : i64, tpu.core_type = #tpu.core_type<tc>} {
    %c0 = arith.constant 0 : index
    %c0_0 = arith.constant 0 : index
    %0 = vector.load %arg0[%c0, %c0_0] : memref<64x64xbf16, #tpu.memory_space<vmem>>, vector<64x64xbf16>
    %c0_1 = arith.constant 0 : index
    %c0_2 = arith.constant 0 : index
    %1 = vector.load %arg1[%c0_1, %c0_2] : memref<64x512xbf16, #tpu.memory_space<vmem>>, vector<64x512xbf16>
    %cst = arith.constant dense<0.000000e+00> : vector<64x512xf32>
    %2 = tpu.matmul %0, %1, %cst {dimension_numbers = #tpu.dot_dimension_numbers<[1], [0], [0], [1], [0, 0, 1, 1], [], []>} : vector<64x64xbf16>, vector<64x512xbf16>, vector<64x512xf32> -> vector<64x512xf32>
    %c0_3 = arith.constant 0 : index
    %c0_4 = arith.constant 0 : index
    %3 = vector.load %arg3[%c0_3, %c0_4] : memref<1x512xf32, #tpu.memory_space<vmem>>, vector<1x512xf32>
    %4 = vector.broadcast %3 : vector<1x512xf32> to vector<64x512xf32>
    %5 = arith.addf %2, %4 : vector<64x512xf32>
    %c0_5 = arith.constant 0 : index
    %c0_6 = arith.constant 0 : index
    %6 = vector.load %arg5[%c0_5, %c0_6] : memref<64x512xf32, #tpu.memory_space<vmem>>, vector<64x512xf32>
    tpu.vector_store %arg5[%c0_5, %c0_6], %5 {strides = array<i32>} : memref<64x512xf32, #tpu.memory_space<vmem>>, vector<64x512xf32>,
    %cst_7 = arith.constant 0.000000e+00 : f32
    %7 = vector.broadcast %cst_7 : f32 to vector<8x128xf32>
    %cst_8 = arith.constant 0.000000e+00 : f32
    %8 = vector.broadcast %cst_8 : f32 to vector<8x128xf32>
    %c0_i32 = arith.constant 0 : i32
    %c8_i32 = arith.constant 8 : i32
    %9 = arith.muli %c0_i32, %c8_i32 : i32
    %10 = tpu.assume_multiple %9, 8 : i32
    %11 = arith.truncf %7 : vector<8x128xf32> to vector<8x128xbf16>
    %c0_9 = arith.constant 0 : index
    %c0_10 = arith.constant 0 : index
    %12 = vector.load %arg2[%c0_9, %c0_10] : memref<128x512xbf16, #tpu.memory_space<vmem>>, vector<128x512xbf16>
    %cst_11 = arith.constant dense<0.000000e+00> : vector<8x512xf32>
    %13 = tpu.matmul %11, %12, %cst_11 {dimension_numbers = #tpu.dot_dimension_numbers<[1], [0], [0], [1], [0, 0, 1, 1], [], []>} : vector<8x128xbf16>, vector<128x512xbf16>, vector<8x512xf32> -> vector<8x512xf32>
    %14 = arith.index_cast %10 : i32 to index
    %c0_12 = arith.constant 0 : index
    %15 = vector.load %arg5[%14, %c0_12] : memref<64x512xf32, #tpu.memory_space<vmem>>, vector<8x512xf32>
    %16 = arith.addf %13, %15 : vector<8x512xf32>
    %17 = vector.extract_strided_slice %16 {offsets = [0, 0], sizes = [8, 384], strides = [1, 1]} : vector<8x512xf32> to vector<8x384xf32>
    %18 = arith.negf %17 : vector<8x384xf32>
    %19 = math.exp %18 : vector<8x384xf32>
    %cst_13 = arith.constant 1.000000e+00 : f32
    %20 = vector.broadcast %cst_13 : f32 to vector<8x384xf32>
    %21 = arith.addf %20, %19 : vector<8x384xf32>
    %22 = arith.divf %20, %21 : vector<8x384xf32>
    %23 = vector.extract_strided_slice %16 {offsets = [0, 384], sizes = [8, 128], strides = [1, 1]} : vector<8x512xf32> to vector<8x128xf32>
    %24 = math.tanh %23 : vector<8x128xf32>
    %25 = vector.extract_strided_slice %22 {offsets = [0, 0], sizes = [8, 128], strides = [1, 1]} : vector<8x384xf32> to vector<8x128xf32>
    %26 = vector.extract_strided_slice %22 {offsets = [0, 128], sizes = [8, 128], strides = [1, 1]} : vector<8x384xf32> to vector<8x128xf32>
    %27 = vector.extract_strided_slice %22 {offsets = [0, 256], sizes = [8, 128], strides = [1, 1]} : vector<8x384xf32> to vector<8x128xf32>
    %28 = arith.mulf %26, %8 : vector<8x128xf32>
    %29 = arith.mulf %25, %24 : vector<8x128xf32>
    %30 = arith.addf %28, %29 : vector<8x128xf32>
    %31 = math.tanh %30 : vector<8x128xf32>
    %32 = arith.mulf %27, %31 : vector<8x128xf32>
    %c1_i32 = arith.constant 1 : i32
    %c8_i32_14 = arith.constant 8 : i32
    %33 = arith.muli %c1_i32, %c8_i32_14 : i32
    %34 = tpu.assume_multiple %33, 8 : i32
    %35 = arith.truncf %32 : vector<8x128xf32> to vector<8x128xbf16>
    %c0_15 = arith.constant 0 : index
    %c0_16 = arith.constant 0 : index
    %36 = vector.load %arg2[%c0_15, %c0_16] : memref<128x512xbf16, #tpu.memory_space<vmem>>, vector<128x512xbf16>
    %cst_17 = arith.constant dense<0.000000e+00> : vector<8x512xf32>
    %37 = tpu.matmul %35, %36, %cst_17 {dimension_numbers = #tpu.dot_dimension_numbers<[1], [0], [0], [1], [0, 0, 1, 1], [], []>} : vector<8x128xbf16>, vector<128x512xbf16>, vector<8x512xf32> -> vector<8x512xf32>
    %38 = arith.index_cast %34 : i32 to index
    %c0_18 = arith.constant 0 : index
    %39 = vector.load %arg5[%38, %c0_18] : memref<64x512xf32, #tpu.memory_space<vmem>>, vector<8x512xf32>
    %40 = arith.addf %37, %39 : vector<8x512xf32>
    %41 = vector.extract_strided_slice %40 {offsets = [0, 0], sizes = [8, 384], strides = [1, 1]} : vector<8x512xf32> to vector<8x384xf32>
    %42 = arith.negf %41 : vector<8x384xf32>
    %43 = math.exp %42 : vector<8x384xf32>
    %cst_19 = arith.constant 1.000000e+00 : f32
    %44 = vector.broadcast %cst_19 : f32 to vector<8x384xf32>
    %45 = arith.addf %44, %43 : vector<8x384xf32>
    %46 = arith.divf %44, %45 : vector<8x384xf32>
    %47 = vector.extract_strided_slice %40 {offsets = [0, 384], sizes = [8, 128], strides = [1, 1]} : vector<8x512xf32> to vector<8x128xf32>
    %48 = math.tanh %47 : vector<8x128xf32>
    %49 = vector.extract_strided_slice %46 {offsets = [0, 0], sizes = [8, 128], strides = [1, 1]} : vector<8x384xf32> to vector<8x128xf32>
    %50 = vector.extract_strided_slice %46 {offsets = [0, 128], sizes = [8, 128], strides = [1, 1]} : vector<8x384xf32> to vector<8x128xf32>
    %51 = vector.extract_strided_slice %46 {offsets = [0, 256], sizes = [8, 128], strides = [1, 1]} : vector<8x384xf32> to vector<8x128xf32>
    %52 = arith.mulf %50, %30 : vector<8x128xf32>
    %53 = arith.mulf %49, %48 : vector<8x128xf32>
    %54 = arith.addf %52, %53 : vector<8x128xf32>
    %55 = math.tanh %54 : vector<8x128xf32>
    %56 = arith.mulf %51, %55 : vector<8x128xf32>
    %c2_i32 = arith.constant 2 : i32
    %c8_i32_20 = arith.constant 8 : i32
    %57 = arith.muli %c2_i32, %c8_i32_20 : i32
    %58 = tpu.assume_multiple %57, 8 : i32
    %59 = arith.truncf %56 : vector<8x128xf32> to vector<8x128xbf16>
    %c0_21 = arith.constant 0 : index
    %c0_22 = arith.constant 0 : index
    %60 = vector.load %arg2[%c0_21, %c0_22] : memref<128x512xbf16, #tpu.memory_space<vmem>>, vector<128x512xbf16>
    %cst_23 = arith.constant dense<0.000000e+00> : vector<8x512xf32>
    %61 = tpu.matmul %59, %60, %cst_23 {dimension_numbers = #tpu.dot_dimension_numbers<[1], [0], [0], [1], [0, 0, 1, 1], [], []>} : vector<8x128xbf16>, vector<128x512xbf16>, vector<8x512xf32> -> vector<8x512xf32>
    %62 = arith.index_cast %58 : i32 to index
    %c0_24 = arith.constant 0 : index
    %63 = vector.load %arg5[%62, %c0_24] : memref<64x512xf32, #tpu.memory_space<vmem>>, vector<8x512xf32>
    %64 = arith.addf %61, %63 : vector<8x512xf32>
    %65 = vector.extract_strided_slice %64 {offsets = [0, 0], sizes = [8, 384], strides = [1, 1]} : vector<8x512xf32> to vector<8x384xf32>
    %66 = arith.negf %65 : vector<8x384xf32>
    %67 = math.exp %66 : vector<8x384xf32>
    %cst_25 = arith.constant 1.000000e+00 : f32
    %68 = vector.broadcast %cst_25 : f32 to vector<8x384xf32>
    %69 = arith.addf %68, %67 : vector<8x384xf32>
    %70 = arith.divf %68, %69 : vector<8x384xf32>
    %71 = vector.extract_strided_slice %64 {offsets = [0, 384], sizes = [8, 128], strides = [1, 1]} : vector<8x512xf32> to vector<8x128xf32>
    %72 = math.tanh %71 : vector<8x128xf32>
    %73 = vector.extract_strided_slice %70 {offsets = [0, 0], sizes = [8, 128], strides = [1, 1]} : vector<8x384xf32> to vector<8x128xf32>
    %74 = vector.extract_strided_slice %70 {offsets = [0, 128], sizes = [8, 128], strides = [1, 1]} : vector<8x384xf32> to vector<8x128xf32>
    %75 = vector.extract_strided_slice %70 {offsets = [0, 256], sizes = [8, 128], strides = [1, 1]} : vector<8x384xf32> to vector<8x128xf32>
    %76 = arith.mulf %74, %54 : vector<8x128xf32>
    %77 = arith.mulf %73, %72 : vector<8x128xf32>
    %78 = arith.addf %76, %77 : vector<8x128xf32>
    %79 = math.tanh %78 : vector<8x128xf32>
    %80 = arith.mulf %75, %79 : vector<8x128xf32>
    %c3_i32 = arith.constant 3 : i32
    %c8_i32_26 = arith.constant 8 : i32
    %81 = arith.muli %c3_i32, %c8_i32_26 : i32
    %82 = tpu.assume_multiple %81, 8 : i32
    %83 = arith.truncf %80 : vector<8x128xf32> to vector<8x128xbf16>
    %c0_27 = arith.constant 0 : index
    %c0_28 = arith.constant 0 : index
    %84 = vector.load %arg2[%c0_27, %c0_28] : memref<128x512xbf16, #tpu.memory_space<vmem>>, vector<128x512xbf16>
    %cst_29 = arith.constant dense<0.000000e+00> : vector<8x512xf32>
    %85 = tpu.matmul %83, %84, %cst_29 {dimension_numbers = #tpu.dot_dimension_numbers<[1], [0], [0], [1], [0, 0, 1, 1], [], []>} : vector<8x128xbf16>, vector<128x512xbf16>, vector<8x512xf32> -> vector<8x512xf32>
    %86 = arith.index_cast %82 : i32 to index
    %c0_30 = arith.constant 0 : index
    %87 = vector.load %arg5[%86, %c0_30] : memref<64x512xf32, #tpu.memory_space<vmem>>, vector<8x512xf32>
    %88 = arith.addf %85, %87 : vector<8x512xf32>
    %89 = vector.extract_strided_slice %88 {offsets = [0, 0], sizes = [8, 384], strides = [1, 1]} : vector<8x512xf32> to vector<8x384xf32>
    %90 = arith.negf %89 : vector<8x384xf32>
    %91 = math.exp %90 : vector<8x384xf32>
    %cst_31 = arith.constant 1.000000e+00 : f32
    %92 = vector.broadcast %cst_31 : f32 to vector<8x384xf32>
    %93 = arith.addf %92, %91 : vector<8x384xf32>
    %94 = arith.divf %92, %93 : vector<8x384xf32>
    %95 = vector.extract_strided_slice %88 {offsets = [0, 384], sizes = [8, 128], strides = [1, 1]} : vector<8x512xf32> to vector<8x128xf32>
    %96 = math.tanh %95 : vector<8x128xf32>
    %97 = vector.extract_strided_slice %94 {offsets = [0, 0], sizes = [8, 128], strides = [1, 1]} : vector<8x384xf32> to vector<8x128xf32>
    %98 = vector.extract_strided_slice %94 {offsets = [0, 128], sizes = [8, 128], strides = [1, 1]} : vector<8x384xf32> to vector<8x128xf32>
    %99 = vector.extract_strided_slice %94 {offsets = [0, 256], sizes = [8, 128], strides = [1, 1]} : vector<8x384xf32> to vector<8x128xf32>
    %100 = arith.mulf %98, %78 : vector<8x128xf32>
    %101 = arith.mulf %97, %96 : vector<8x128xf32>
    %102 = arith.addf %100, %101 : vector<8x128xf32>
    %103 = math.tanh %102 : vector<8x128xf32>
    %104 = arith.mulf %99, %103 : vector<8x128xf32>
    %c4_i32 = arith.constant 4 : i32
    %c8_i32_32 = arith.constant 8 : i32
    %105 = arith.muli %c4_i32, %c8_i32_32 : i32
    %106 = tpu.assume_multiple %105, 8 : i32
    %107 = arith.truncf %104 : vector<8x128xf32> to vector<8x128xbf16>
    %c0_33 = arith.constant 0 : index
    %c0_34 = arith.constant 0 : index
    %108 = vector.load %arg2[%c0_33, %c0_34] : memref<128x512xbf16, #tpu.memory_space<vmem>>, vector<128x512xbf16>
    %cst_35 = arith.constant dense<0.000000e+00> : vector<8x512xf32>
    %109 = tpu.matmul %107, %108, %cst_35 {dimension_numbers = #tpu.dot_dimension_numbers<[1], [0], [0], [1], [0, 0, 1, 1], [], []>} : vector<8x128xbf16>, vector<128x512xbf16>, vector<8x512xf32> -> vector<8x512xf32>
    %110 = arith.index_cast %106 : i32 to index
    %c0_36 = arith.constant 0 : index
    %111 = vector.load %arg5[%110, %c0_36] : memref<64x512xf32, #tpu.memory_space<vmem>>, vector<8x512xf32>
    %112 = arith.addf %109, %111 : vector<8x512xf32>
    %113 = vector.extract_strided_slice %112 {offsets = [0, 0], sizes = [8, 384], strides = [1, 1]} : vector<8x512xf32> to vector<8x384xf32>
    %114 = arith.negf %113 : vector<8x384xf32>
    %115 = math.exp %114 : vector<8x384xf32>
    %cst_37 = arith.constant 1.000000e+00 : f32
    %116 = vector.broadcast %cst_37 : f32 to vector<8x384xf32>
    %117 = arith.addf %116, %115 : vector<8x384xf32>
    %118 = arith.divf %116, %117 : vector<8x384xf32>
    %119 = vector.extract_strided_slice %112 {offsets = [0, 384], sizes = [8, 128], strides = [1, 1]} : vector<8x512xf32> to vector<8x128xf32>
    %120 = math.tanh %119 : vector<8x128xf32>
    %121 = vector.extract_strided_slice %118 {offsets = [0, 0], sizes = [8, 128], strides = [1, 1]} : vector<8x384xf32> to vector<8x128xf32>
    %122 = vector.extract_strided_slice %118 {offsets = [0, 128], sizes = [8, 128], strides = [1, 1]} : vector<8x384xf32> to vector<8x128xf32>
    %123 = vector.extract_strided_slice %118 {offsets = [0, 256], sizes = [8, 128], strides = [1, 1]} : vector<8x384xf32> to vector<8x128xf32>
    %124 = arith.mulf %122, %102 : vector<8x128xf32>
    %125 = arith.mulf %121, %120 : vector<8x128xf32>
    %126 = arith.addf %124, %125 : vector<8x128xf32>
    %127 = math.tanh %126 : vector<8x128xf32>
    %128 = arith.mulf %123, %127 : vector<8x128xf32>
    %c5_i32 = arith.constant 5 : i32
    %c8_i32_38 = arith.constant 8 : i32
    %129 = arith.muli %c5_i32, %c8_i32_38 : i32
    %130 = tpu.assume_multiple %129, 8 : i32
    %131 = arith.truncf %128 : vector<8x128xf32> to vector<8x128xbf16>
    %c0_39 = arith.constant 0 : index
    %c0_40 = arith.constant 0 : index
    %132 = vector.load %arg2[%c0_39, %c0_40] : memref<128x512xbf16, #tpu.memory_space<vmem>>, vector<128x512xbf16>
    %cst_41 = arith.constant dense<0.000000e+00> : vector<8x512xf32>
    %133 = tpu.matmul %131, %132, %cst_41 {dimension_numbers = #tpu.dot_dimension_numbers<[1], [0], [0], [1], [0, 0, 1, 1], [], []>} : vector<8x128xbf16>, vector<128x512xbf16>, vector<8x512xf32> -> vector<8x512xf32>
    %134 = arith.index_cast %130 : i32 to index
    %c0_42 = arith.constant 0 : index
    %135 = vector.load %arg5[%134, %c0_42] : memref<64x512xf32, #tpu.memory_space<vmem>>, vector<8x512xf32>
    %136 = arith.addf %133, %135 : vector<8x512xf32>
    %137 = vector.extract_strided_slice %136 {offsets = [0, 0], sizes = [8, 384], strides = [1, 1]} : vector<8x512xf32> to vector<8x384xf32>
    %138 = arith.negf %137 : vector<8x384xf32>
    %139 = math.exp %138 : vector<8x384xf32>
    %cst_43 = arith.constant 1.000000e+00 : f32
    %140 = vector.broadcast %cst_43 : f32 to vector<8x384xf32>
    %141 = arith.addf %140, %139 : vector<8x384xf32>
    %142 = arith.divf %140, %141 : vector<8x384xf32>
    %143 = vector.extract_strided_slice %136 {offsets = [0, 384], sizes = [8, 128], strides = [1, 1]} : vector<8x512xf32> to vector<8x128xf32>
    %144 = math.tanh %143 : vector<8x128xf32>
    %145 = vector.extract_strided_slice %142 {offsets = [0, 0], sizes = [8, 128], strides = [1, 1]} : vector<8x384xf32> to vector<8x128xf32>
    %146 = vector.extract_strided_slice %142 {offsets = [0, 128], sizes = [8, 128], strides = [1, 1]} : vector<8x384xf32> to vector<8x128xf32>
    %147 = vector.extract_strided_slice %142 {offsets = [0, 256], sizes = [8, 128], strides = [1, 1]} : vector<8x384xf32> to vector<8x128xf32>
    %148 = arith.mulf %146, %126 : vector<8x128xf32>
    %149 = arith.mulf %145, %144 : vector<8x128xf32>
    %150 = arith.addf %148, %149 : vector<8x128xf32>
    %151 = math.tanh %150 : vector<8x128xf32>
    %152 = arith.mulf %147, %151 : vector<8x128xf32>
    %c6_i32 = arith.constant 6 : i32
    %c8_i32_44 = arith.constant 8 : i32
    %153 = arith.muli %c6_i32, %c8_i32_44 : i32
    %154 = tpu.assume_multiple %153, 8 : i32
    %155 = arith.truncf %152 : vector<8x128xf32> to vector<8x128xbf16>
    %c0_45 = arith.constant 0 : index
    %c0_46 = arith.constant 0 : index
    %156 = vector.load %arg2[%c0_45, %c0_46] : memref<128x512xbf16, #tpu.memory_space<vmem>>, vector<128x512xbf16>
    %cst_47 = arith.constant dense<0.000000e+00> : vector<8x512xf32>
    %157 = tpu.matmul %155, %156, %cst_47 {dimension_numbers = #tpu.dot_dimension_numbers<[1], [0], [0], [1], [0, 0, 1, 1], [], []>} : vector<8x128xbf16>, vector<128x512xbf16>, vector<8x512xf32> -> vector<8x512xf32>
    %158 = arith.index_cast %154 : i32 to index
    %c0_48 = arith.constant 0 : index
    %159 = vector.load %arg5[%158, %c0_48] : memref<64x512xf32, #tpu.memory_space<vmem>>, vector<8x512xf32>
    %160 = arith.addf %157, %159 : vector<8x512xf32>
    %161 = vector.extract_strided_slice %160 {offsets = [0, 0], sizes = [8, 384], strides = [1, 1]} : vector<8x512xf32> to vector<8x384xf32>
    %162 = arith.negf %161 : vector<8x384xf32>
    %163 = math.exp %162 : vector<8x384xf32>
    %cst_49 = arith.constant 1.000000e+00 : f32
    %164 = vector.broadcast %cst_49 : f32 to vector<8x384xf32>
    %165 = arith.addf %164, %163 : vector<8x384xf32>
    %166 = arith.divf %164, %165 : vector<8x384xf32>
    %167 = vector.extract_strided_slice %160 {offsets = [0, 384], sizes = [8, 128], strides = [1, 1]} : vector<8x512xf32> to vector<8x128xf32>
    %168 = math.tanh %167 : vector<8x128xf32>
    %169 = vector.extract_strided_slice %166 {offsets = [0, 0], sizes = [8, 128], strides = [1, 1]} : vector<8x384xf32> to vector<8x128xf32>
    %170 = vector.extract_strided_slice %166 {offsets = [0, 128], sizes = [8, 128], strides = [1, 1]} : vector<8x384xf32> to vector<8x128xf32>
    %171 = vector.extract_strided_slice %166 {offsets = [0, 256], sizes = [8, 128], strides = [1, 1]} : vector<8x384xf32> to vector<8x128xf32>
    %172 = arith.mulf %170, %150 : vector<8x128xf32>
    %173 = arith.mulf %169, %168 : vector<8x128xf32>
    %174 = arith.addf %172, %173 : vector<8x128xf32>
    %175 = math.tanh %174 : vector<8x128xf32>
    %176 = arith.mulf %171, %175 : vector<8x128xf32>
    %c7_i32 = arith.constant 7 : i32
    %c8_i32_50 = arith.constant 8 : i32
    %177 = arith.muli %c7_i32, %c8_i32_50 : i32
    %178 = tpu.assume_multiple %177, 8 : i32
    %179 = arith.truncf %176 : vector<8x128xf32> to vector<8x128xbf16>
    %c0_51 = arith.constant 0 : index
    %c0_52 = arith.constant 0 : index
    %180 = vector.load %arg2[%c0_51, %c0_52] : memref<128x512xbf16, #tpu.memory_space<vmem>>, vector<128x512xbf16>
    %cst_53 = arith.constant dense<0.000000e+00> : vector<8x512xf32>
    %181 = tpu.matmul %179, %180, %cst_53 {dimension_numbers = #tpu.dot_dimension_numbers<[1], [0], [0], [1], [0, 0, 1, 1], [], []>} : vector<8x128xbf16>, vector<128x512xbf16>, vector<8x512xf32> -> vector<8x512xf32>
    %182 = arith.index_cast %178 : i32 to index
    %c0_54 = arith.constant 0 : index
    %183 = vector.load %arg5[%182, %c0_54] : memref<64x512xf32, #tpu.memory_space<vmem>>, vector<8x512xf32>
    %184 = arith.addf %181, %183 : vector<8x512xf32>
    %185 = vector.extract_strided_slice %184 {offsets = [0, 0], sizes = [8, 384], strides = [1, 1]} : vector<8x512xf32> to vector<8x384xf32>
    %186 = arith.negf %185 : vector<8x384xf32>
    %187 = math.exp %186 : vector<8x384xf32>
    %cst_55 = arith.constant 1.000000e+00 : f32
    %188 = vector.broadcast %cst_55 : f32 to vector<8x384xf32>
    %189 = arith.addf %188, %187 : vector<8x384xf32>
    %190 = arith.divf %188, %189 : vector<8x384xf32>
    %191 = vector.extract_strided_slice %184 {offsets = [0, 384], sizes = [8, 128], strides = [1, 1]} : vector<8x512xf32> to vector<8x128xf32>
    %192 = math.tanh %191 : vector<8x128xf32>
    %193 = vector.extract_strided_slice %190 {offsets = [0, 0], sizes = [8, 128], strides = [1, 1]} : vector<8x384xf32> to vector<8x128xf32>
    %194 = vector.extract_strided_slice %190 {offsets = [0, 128], sizes = [8, 128], strides = [1, 1]} : vector<8x384xf32> to vector<8x128xf32>
    %195 = vector.extract_strided_slice %190 {offsets = [0, 256], sizes = [8, 128], strides = [1, 1]} : vector<8x384xf32> to vector<8x128xf32>
    %196 = arith.mulf %194, %174 : vector<8x128xf32>
    %197 = arith.mulf %193, %192 : vector<8x128xf32>
    %198 = arith.addf %196, %197 : vector<8x128xf32>
    %199 = math.tanh %198 : vector<8x128xf32>
    %200 = arith.mulf %195, %199 : vector<8x128xf32>
    %c8_i32_56 = arith.constant 8 : i32
    %c0_57 = arith.constant 0 : index
    %c0_58 = arith.constant 0 : index
    %c0_59 = arith.constant 0 : index
    %201 = vector.load %arg4[%c0_57, %c0_58, %c0_59] : memref<1x8x128xf32, #tpu.memory_space<vmem>>, vector<1x8x128xf32>
    %202 = vector.shape_cast %201 : vector<1x8x128xf32> to vector<8x128xf32>
    %203 = vector.shape_cast %200 : vector<8x128xf32> to vector<1x8x128xf32>
    tpu.vector_store %arg4[%c0_57, %c0_58, %c0_59], %203 {strides = array<i32>} : memref<1x8x128xf32, #tpu.memory_space<vmem>>, vector<1x8x128xf32>,
    return
  }
}

</mosaic_0001>

<llo_original>
// kernel: tpu_custom_call.1
$region0: #{tpu_custom_call.1}
  #allocation0 [shape = 'u32[]', space=smem, size = 0x4, offset = 0x4, fixed_abs, tag = 'smem constant byte address 0x4 - core index']
  #allocation1 [shape = 'u32[144,128]{1,0:T(1,128)}', space=vmem, size = 0x12000, scoped, tag = 'internal scratch']
  #allocation2 [shape = 'f32[64,512]{1,0:T(8,128)}', space=vmem, size = 0x20000, scoped, tag = 'scratch operand']
  %s0 = inlined_call_operand.hbm [shape: bf16[64,64], index: 0, kind: input, shape index: {}]
  %s1 = inlined_call_operand.hbm [shape: bf16[64,512], index: 1, kind: input, shape index: {}]
  %s2 = inlined_call_operand.hbm [shape: bf16[128,512], index: 2, kind: input, shape index: {}]
  %s3 = inlined_call_operand.vmem [shape: f32[1,512], index: 3, kind: input, shape index: {}]
  %s4 = inlined_call_operand.hbm [shape: f32[1,8,128], index: 4, kind: output, shape index: {}]
  %s5 = sld [smem:[#allocation0]]
  $region38: #{tpu_custom_call.1} parent=0
    _
  %s7 = ssub.s32 1, %s5
  %s8 = scalar_select 0, %s7, %s5
  $region1: #{tpu_custom_call.1} parent=0
    #allocation3 [shape = 'u8[16384]{0}', space=vmem, size = 0x4000, scoped, tag = 'input window, operand 0, single buffered']
    #allocation4 [shape = 's32[1]{0}', space=sflag, size = 0x4, scoped, tag = 'scoped memory for tpu_custom_call.1']
    #allocation5 [shape = 's32[1]{0}', space=sflag, size = 0x4, scoped, tag = 'scoped memory for tpu_custom_call.1']
    #allocation6 [shape = 'u8[65536]{0}', space=vmem, size = 0x10000, scoped, tag = 'input window, operand 1, single buffered']
    #allocation7 [shape = 's32[1]{0}', space=sflag, size = 0x4, scoped, tag = 'scoped memory for tpu_custom_call.1']
    #allocation8 [shape = 'u8[131072]{0}', space=vmem, size = 0x20000, scoped, tag = 'input window, operand 2, single buffered']
    #allocation9 [shape = 'u8[4096]{0}', space=vmem, size = 0x1000, scoped, tag = 'output window, operand 0, single buffered']
    %9 = vsyncpa [#allocation4], 0
    %10 = vsyncpa [#allocation7], 0
    %11 = vsyncpa [#allocation5], 0
    // Predicated region
    $region2: #{tpu_custom_call.1} parent=1 // pred_check
      _
    $region3: #{tpu_custom_call.1} parent=1 // pred_check_branch
      %13 = sbr.rel (0) target = $region5
    $region4: #{tpu_custom_call.1} parent=1 // pred_region
      %s15 = ssub.s32 512, 512
      %16 = vsyncadd [#allocation4], %s15
      %s17 = sshll.u32 [#allocation3], 4
      %s18 = int_to_ptr.vmem [resolvable:$true] %s17
      %23 = dma.hbm_to_vmem [thread:$0]  %s0, 512, %s18, [#allocation4], 64, 64, 4
    $region5: #{tpu_custom_call.1} parent=1 // pred_fallthru
      _
    // Predicated region
    $region6: #{tpu_custom_call.1} parent=1 // pred_check
      _
    $region7: #{tpu_custom_call.1} parent=1 // pred_check_branch
      %25 = sbr.rel (0) target = $region9
    $region8: #{tpu_custom_call.1} parent=1 // pred_region
      %s27 = ssub.s32 2048, 2048
      %28 = vsyncadd [#allocation7], %s27
      %s29 = sshll.u32 [#allocation6], 4
      %s30 = int_to_ptr.vmem [resolvable:$true] %s29
      %35 = dma.hbm_to_vmem [thread:$0]  %s1, 2048, %s30, [#allocation7], 256, 256, 16
    $region9: #{tpu_custom_call.1} parent=1 // pred_fallthru
      _
    // Predicated region
    $region10: #{tpu_custom_call.1} parent=1 // pred_check
      _
    $region11: #{tpu_custom_call.1} parent=1 // pred_check_branch
      %37 = sbr.rel (0) target = $region13
    $region12: #{tpu_custom_call.1} parent=1 // pred_region
      %s39 = ssub.s32 4096, 4096
      %40 = vsyncadd [#allocation7], %s39
      %s41 = sshll.u32 [#allocation8], 4
      %s42 = int_to_ptr.vmem [resolvable:$true] %s41
      %47 = dma.hbm_to_vmem [thread:$0]  %s2, 4096, %s42, [#allocation7], 256, 256, 16
    $region13: #{tpu_custom_call.1} parent=1 // pred_fallthru
      _
    // Predicated region
    $region14: #{tpu_custom_call.1} parent=1 // pred_check
      _
    $region15: #{tpu_custom_call.1} parent=1 // pred_check_branch
      %49 = sbr.rel (0) target = $region17
    $region16: #{tpu_custom_call.1} parent=1 // pred_region
      _
    $region17: #{tpu_custom_call.1} parent=1 // pred_fallthru
      _
    // Predicated region
    $region18: #{tpu_custom_call.1} parent=1 // pred_check
      _
    $region19: #{tpu_custom_call.1} parent=1 // pred_check_branch
      %51 = sbr.rel (0) target = $region21
    $region20: #{tpu_custom_call.1} parent=1 // pred_region
      %52 = dma.done [#allocation4], 512
    $region21: #{tpu_custom_call.1} parent=1 // pred_fallthru
      _
    // Predicated region
    $region22: #{tpu_custom_call.1} parent=1 // pred_check
      _
    $region23: #{tpu_custom_call.1} parent=1 // pred_check_branch
      %54 = sbr.rel (0) target = $region25
    $region24: #{tpu_custom_call.1} parent=1 // pred_region
      %55 = dma.done [#allocation7], 2048
    $region25: #{tpu_custom_call.1} parent=1 // pred_fallthru
      _
    // Predicated region
    $region26: #{tpu_custom_call.1} parent=1 // pred_check
      _
    $region27: #{tpu_custom_call.1} parent=1 // pred_check_branch
      %57 = sbr.rel (0) target = $region29
    $region28: #{tpu_custom_call.1} parent=1 // pred_region
      %58 = dma.done [#allocation7], 4096
    $region29: #{tpu_custom_call.1} parent=1 // pred_fallthru
      _
    %v60 = vld [vmem:[#allocation3] sm:$0xf]
    %v61 = vld [vmem:[#allocation3 + $0x4] sm:$0xf]
    %v62 = vld [vmem:[#allocation3 + $0x8] sm:$0xf]
    %v63 = vld [vmem:[#allocation3 + $0xc] sm:$0xf]
    %v64 = vld [vmem:[#allocation3 + $0x10] sm:$0xf]
    %v65 = vld [vmem:[#allocation3 + $0x14] sm:$0xf]
    %v66 = vld [vmem:[#allocation3 + $0x18] sm:$0xf]
    %v67 = vld [vmem:[#allocation3 + $0x1c] sm:$0xf]
    %v68 = vld [vmem:[#allocation6] sm:$0xff]
    %v69 = vld [vmem:[#allocation6 + $0x8] sm:$0xff]
    %v70 = vld [vmem:[#allocation6 + $0x10] sm:$0xff]
    %v71 = vld [vmem:[#allocation6 + $0x18] sm:$0xff]
    %v72 = vld [vmem:[#allocation6 + $0x20] sm:$0xff]
    %v73 = vld [vmem:[#allocation6 + $0x28] sm:$0xff]
    %v74 = vld [vmem:[#allocation6 + $0x30] sm:$0xff]
    %v75 = vld [vmem:[#allocation6 + $0x38] sm:$0xff]
    %v76 = vld [vmem:[#allocation6 + $0x40] sm:$0xff]
    %v77 = vld [vmem:[#allocation6 + $0x48] sm:$0xff]
    %v78 = vld [vmem:[#allocation6 + $0x50] sm:$0xff]
    %v79 = vld [vmem:[#allocation6 + $0x58] sm:$0xff]
    %v80 = vld [vmem:[#allocation6 + $0x60] sm:$0xff]
    %v81 = vld [vmem:[#allocation6 + $0x68] sm:$0xff]
    %v82 = vld [vmem:[#allocation6 + $0x70] sm:$0xff]
    %v83 = vld [vmem:[#allocation6 + $0x78] sm:$0xff]
    %v84 = vld [vmem:[%s3] sm:$0xf]
    %v86 = vlaneseq
    %v87 = vshrl.u32 %v86, 7
    %v88 = vsub.s32 0, %v87
    %v89 = vrot.slane %v84, %v88
    %v90 = vlaneseq
    %v91 = vshrl.u32 %v90, 7
    %v92 = vsub.s32 1, %v91
    %v93 = vrot.slane %v84, %v92
    %v94 = vlaneseq
    %v95 = vshrl.u32 %v94, 7
    %v96 = vsub.s32 2, %v95
    %v97 = vrot.slane %v84, %v96
    %v98 = vlaneseq
    %v99 = vshrl.u32 %v98, 7
    %v100 = vsub.s32 3, %v99
    %v101 = vrot.slane %v84, %v100
    %v114 = vunpack.c.l.b16 %v60
    %v115 = vunpack.c.l.b16 %v61
    %v116 = vunpack.c.l.b16 %v62
    %v117 = vunpack.c.l.b16 %v63
    %v118 = vunpack.c.l.b16 %v64
    %v119 = vunpack.c.l.b16 %v65
    %v120 = vunpack.c.l.b16 %v66
    %v121 = vunpack.c.l.b16 %v67
    %v122 = vpack.c.b16 %v115, %v114
    %v123 = vpack.c.b16 %v117, %v116
    %v124 = vpack.c.b16 %v119, %v118
    %v125 = vpack.c.b16 %v121, %v120
    %v142 = vunpack.c.l.b16 %v68
    %v143 = vunpack.c.h.b16 %v68
    %v144 = vunpack.c.l.b16 %v69
    %v145 = vunpack.c.h.b16 %v69
    %v146 = vunpack.c.l.b16 %v70
    %v147 = vunpack.c.h.b16 %v70
    %v148 = vunpack.c.l.b16 %v71
    %v149 = vunpack.c.h.b16 %v71
    %v150 = vunpack.c.l.b16 %v72
    %v151 = vunpack.c.h.b16 %v72
    %v152 = vunpack.c.l.b16 %v73
    %v153 = vunpack.c.h.b16 %v73
    %v154 = vunpack.c.l.b16 %v74
    %v155 = vunpack.c.h.b16 %v74
    %v156 = vunpack.c.l.b16 %v75
    %v157 = vunpack.c.h.b16 %v75
    %v158 = vunpack.c.l.b16 %v76
    %v159 = vunpack.c.h.b16 %v76
    %v160 = vunpack.c.l.b16 %v77
    %v161 = vunpack.c.h.b16 %v77
    %v162 = vunpack.c.l.b16 %v78
    %v163 = vunpack.c.h.b16 %v78
    %v164 = vunpack.c.l.b16 %v79
    %v165 = vunpack.c.h.b16 %v79
    %v166 = vunpack.c.l.b16 %v80
    %v167 = vunpack.c.h.b16 %v80
    %v168 = vunpack.c.l.b16 %v81
    %v169 = vunpack.c.h.b16 %v81
    %v170 = vunpack.c.l.b16 %v82
    %v171 = vunpack.c.h.b16 %v82
    %v172 = vunpack.c.l.b16 %v83
    %v173 = vunpack.c.h.b16 %v83
    %v174 = vpack.c.b16 %v146, %v142
    %v175 = vpack.c.b16 %v147, %v143
    %v176 = vpack.c.b16 %v148, %v144
    %v177 = vpack.c.b16 %v149, %v145
    %v178 = vpack.c.b16 %v154, %v150
    %v179 = vpack.c.b16 %v155, %v151
    %v180 = vpack.c.b16 %v156, %v152
    %v181 = vpack.c.b16 %v157, %v153
    %v182 = vpack.c.b16 %v162, %v158
    %v183 = vpack.c.b16 %v163, %v159
    %v184 = vpack.c.b16 %v164, %v160
    %v185 = vpack.c.b16 %v165, %v161
    %v186 = vpack.c.b16 %v170, %v166
    %v187 = vpack.c.b16 %v171, %v167
    %v188 = vpack.c.b16 %v172, %v168
    %v189 = vpack.c.b16 %v173, %v169
    %vm206 = vcmask 523264
    %v208 = vsel %vm206, %v122, 0
    %v211 = vsel %vm206, %v123, 0
    %v214 = vsel %vm206, %v124, 0
    %v217 = vsel %vm206, %v125, 0
    %219 = vmatprep.subr.bf16.mxu0 0
    %220 = vmatpush1.bf16.msra.mxu0 0
    %221 = vmatprep.subr.bf16.mxu0 0
    %222 = vmatpush1.bf16.msra.mxu0 0
    %223 = vmatprep.subr.bf16.mxu0 0
    %224 = vmatpush1.bf16.msra.mxu0 0
    %225 = vmatprep.subr.bf16.mxu0 0
    %226 = vmatpush1.bf16.msra.mxu0 0
    %227 = vmatprep.subr.bf16.mxu0 %v187
    %228 = vmatpush1.bf16.msra.mxu0 %v186
    %229 = vmatprep.subr.bf16.mxu0 %v183
    %230 = vmatpush1.bf16.msra.mxu0 %v182
    %231 = vmatprep.subr.bf16.mxu0 %v179
    %232 = vmatpush1.bf16.msra.mxu0 %v178
    %233 = vmatprep.subr.bf16.mxu0 %v175
    %234 = vmatpush1.bf16.msra.mxu0 %v174
    %235 = vmatprep.subr.bf16.mxu0 0
    %236 = vmatpush2.bf16.msra.mxu0 0
    %237 = vmatprep.subr.bf16.mxu0 0
    %238 = vmatpush2.bf16.msra.mxu0 0
    %239 = vmatprep.subr.bf16.mxu0 0
    %240 = vmatpush2.bf16.msra.mxu0 0
    %241 = vmatprep.subr.bf16.mxu0 0
    %242 = vmatpush2.bf16.msra.mxu0 0
    %243 = vmatprep.subr.bf16.mxu0 0
    %244 = vmatpush2.bf16.msra.mxu0 0
    %245 = vmatprep.subr.bf16.mxu0 0
    %246 = vmatpush2.bf16.msra.mxu0 0
    %247 = vmatprep.subr.bf16.mxu0 0
    %248 = vmatpush2.bf16.msra.mxu0 0
    %249 = vmatprep.subr.bf16.mxu0 0
    %250 = vmatpush2.bf16.msra.mxu0 0
    %251 = vmatprep.mubr.bf16.mxu0 0
    %252 = vmatmul.mubr.bf16.gmra.mxu0 %v208
    %v253 = vpop.f32.mrf.mxu0
    %v254 = vadd.f32 %v89, %v253
    %v255 = vpop.f32.mrf.mxu0
    %v256 = vadd.f32 %v93, %v255
    %v257 = vpop.f32.mrf.mxu0
    %v258 = vadd.f32 %v89, %v257
    %v259 = vpop.f32.mrf.mxu0
    %v260 = vadd.f32 %v93, %v259
    %261 = vmatprep.mubr.bf16.mxu0 0
    %262 = vmatmul.mubr.bf16.gmra.mxu0 %v211
    %v263 = vpop.f32.mrf.mxu0
    %v264 = vadd.f32 %v89, %v263
    %v265 = vpop.f32.mrf.mxu0
    %v266 = vadd.f32 %v93, %v265
    %v267 = vpop.f32.mrf.mxu0
    %v268 = vadd.f32 %v89, %v267
    %v269 = vpop.f32.mrf.mxu0
    %v270 = vadd.f32 %v93, %v269
    %271 = vmatprep.mubr.bf16.mxu0 0
    %272 = vmatmul.mubr.bf16.gmra.mxu0 %v214
    %v273 = vpop.f32.mrf.mxu0
    %v274 = vadd.f32 %v89, %v273
    %v275 = vpop.f32.mrf.mxu0
    %v276 = vadd.f32 %v93, %v275
    %v277 = vpop.f32.mrf.mxu0
    %v278 = vadd.f32 %v89, %v277
    %v279 = vpop.f32.mrf.mxu0
    %v280 = vadd.f32 %v93, %v279
    %281 = vmatprep.mubr.bf16.mxu0 0
    %282 = vmatmul.mubr.bf16.gmra.mxu0 %v217
    %v283 = vpop.f32.mrf.mxu0
    %v284 = vadd.f32 %v89, %v283
    %v285 = vpop.f32.mrf.mxu0
    %v286 = vadd.f32 %v93, %v285
    %v287 = vpop.f32.mrf.mxu0
    %v288 = vadd.f32 %v89, %v287
    %v289 = vpop.f32.mrf.mxu0
    %v290 = vadd.f32 %v93, %v289
    %291 = vdwg.mxu0
    %292 = vmatprep.subr.bf16.mxu0 0
    %293 = vmatpush1.bf16.msra.mxu0 0
    %294 = vmatprep.subr.bf16.mxu0 0
    %295 = vmatpush1.bf16.msra.mxu0 0
    %296 = vmatprep.subr.bf16.mxu0 0
    %297 = vmatpush1.bf16.msra.mxu0 0
    %298 = vmatprep.subr.bf16.mxu0 0
    %299 = vmatpush1.bf16.msra.mxu0 0
    %300 = vmatprep.subr.bf16.mxu0 %v189
    %301 = vmatpush1.bf16.msra.mxu0 %v188
    %302 = vmatprep.subr.bf16.mxu0 %v185
    %303 = vmatpush1.bf16.msra.mxu0 %v184
    %304 = vmatprep.subr.bf16.mxu0 %v181
    %305 = vmatpush1.bf16.msra.mxu0 %v180
    %306 = vmatprep.subr.bf16.mxu0 %v177
    %307 = vmatpush1.bf16.msra.mxu0 %v176
    %308 = vmatprep.subr.bf16.mxu0 0
    %309 = vmatpush2.bf16.msra.mxu0 0
    %310 = vmatprep.subr.bf16.mxu0 0
    %311 = vmatpush2.bf16.msra.mxu0 0
    %312 = vmatprep.subr.bf16.mxu0 0
    %313 = vmatpush2.bf16.msra.mxu0 0
    %314 = vmatprep.subr.bf16.mxu0 0
    %315 = vmatpush2.bf16.msra.mxu0 0
    %316 = vmatprep.subr.bf16.mxu0 0
    %317 = vmatpush2.bf16.msra.mxu0 0
    %318 = vmatprep.subr.bf16.mxu0 0
    %319 = vmatpush2.bf16.msra.mxu0 0
    %320 = vmatprep.subr.bf16.mxu0 0
    %321 = vmatpush2.bf16.msra.mxu0 0
    %322 = vmatprep.subr.bf16.mxu0 0
    %323 = vmatpush2.bf16.msra.mxu0 0
    %324 = vmatprep.mubr.bf16.mxu0 0
    %325 = vmatmul.mubr.bf16.gmra.mxu0 %v208
    %v326 = vpop.f32.mrf.mxu0
    %v327 = vadd.f32 %v97, %v326
    %v328 = vpop.f32.mrf.mxu0
    %v329 = vadd.f32 %v101, %v328
    %v330 = vpop.f32.mrf.mxu0
    %v331 = vadd.f32 %v97, %v330
    %v332 = vpop.f32.mrf.mxu0
    %v333 = vadd.f32 %v101, %v332
    %334 = vmatprep.mubr.bf16.mxu0 0
    %335 = vmatmul.mubr.bf16.gmra.mxu0 %v211
    %v336 = vpop.f32.mrf.mxu0
    %v337 = vadd.f32 %v97, %v336
    %v338 = vpop.f32.mrf.mxu0
    %v339 = vadd.f32 %v101, %v338
    %v340 = vpop.f32.mrf.mxu0
    %v341 = vadd.f32 %v97, %v340
    %v342 = vpop.f32.mrf.mxu0
    %v343 = vadd.f32 %v101, %v342
    %344 = vmatprep.mubr.bf16.mxu0 0
    %345 = vmatmul.mubr.bf16.gmra.mxu0 %v214
    %v346 = vpop.f32.mrf.mxu0
    %v347 = vadd.f32 %v97, %v346
    %v348 = vpop.f32.mrf.mxu0
    %v349 = vadd.f32 %v101, %v348
    %v350 = vpop.f32.mrf.mxu0
    %v351 = vadd.f32 %v97, %v350
    %v352 = vpop.f32.mrf.mxu0
    %v353 = vadd.f32 %v101, %v352
    %354 = vmatprep.mubr.bf16.mxu0 0
    %355 = vmatmul.mubr.bf16.gmra.mxu0 %v217
    %v356 = vpop.f32.mrf.mxu0
    %v357 = vadd.f32 %v97, %v356
    %v358 = vpop.f32.mrf.mxu0
    %v359 = vadd.f32 %v101, %v358
    %v360 = vpop.f32.mrf.mxu0
    %v361 = vadd.f32 %v97, %v360
    %v362 = vpop.f32.mrf.mxu0
    %v363 = vadd.f32 %v101, %v362
    %364 = vdwg.mxu0
    %365 = vst [vmem:[#allocation2] sm:$0xff] %v254
    %366 = vst [vmem:[#allocation2 + $0x8] sm:$0xff] %v256
    %367 = vst [vmem:[#allocation2 + $0x10] sm:$0xff] %v327
    %368 = vst [vmem:[#allocation2 + $0x18] sm:$0xff] %v329
    %369 = vst [vmem:[#allocation2 + $0x20] sm:$0xff] %v258
    %370 = vst [vmem:[#allocation2 + $0x28] sm:$0xff] %v260
    %371 = vst [vmem:[#allocation2 + $0x30] sm:$0xff] %v331
    %372 = vst [vmem:[#allocation2 + $0x38] sm:$0xff] %v333
    %373 = vst [vmem:[#allocation2 + $0x40] sm:$0xff] %v264
    %374 = vst [vmem:[#allocation2 + $0x48] sm:$0xff] %v266
    %375 = vst [vmem:[#allocation2 + $0x50] sm:$0xff] %v337
    %376 = vst [vmem:[#allocation2 + $0x58] sm:$0xff] %v339
    %377 = vst [vmem:[#allocation2 + $0x60] sm:$0xff] %v268
    %378 = vst [vmem:[#allocation2 + $0x68] sm:$0xff] %v270
    %379 = vst [vmem:[#allocation2 + $0x70] sm:$0xff] %v341
    %380 = vst [vmem:[#allocation2 + $0x78] sm:$0xff] %v343
    %381 = vst [vmem:[#allocation2 + $0x80] sm:$0xff] %v274
    %382 = vst [vmem:[#allocation2 + $0x88] sm:$0xff] %v276
    %383 = vst [vmem:[#allocation2 + $0x90] sm:$0xff] %v347
    %384 = vst [vmem:[#allocation2 + $0x98] sm:$0xff] %v349
    %385 = vst [vmem:[#allocation2 + $0xa0] sm:$0xff] %v278
    %386 = vst [vmem:[#allocation2 + $0xa8] sm:$0xff] %v280
    %387 = vst [vmem:[#allocation2 + $0xb0] sm:$0xff] %v351
    %388 = vst [vmem:[#allocation2 + $0xb8] sm:$0xff] %v353
    %389 = vst [vmem:[#allocation2 + $0xc0] sm:$0xff] %v284
    %390 = vst [vmem:[#allocation2 + $0xc8] sm:$0xff] %v286
    %391 = vst [vmem:[#allocation2 + $0xd0] sm:$0xff] %v357
    %392 = vst [vmem:[#allocation2 + $0xd8] sm:$0xff] %v359
    %393 = vst [vmem:[#allocation2 + $0xe0] sm:$0xff] %v288
    %394 = vst [vmem:[#allocation2 + $0xe8] sm:$0xff] %v290
    %395 = vst [vmem:[#allocation2 + $0xf0] sm:$0xff] %v361
    %396 = vst [vmem:[#allocation2 + $0xf8] sm:$0xff] %v363
    %v397 = vld [vmem:[#allocation8] sm:$0xff]
    %v398 = vld [vmem:[#allocation8 + $0x8] sm:$0xff]
    %v399 = vld [vmem:[#allocation8 + $0x10] sm:$0xff]
    %v400 = vld [vmem:[#allocation8 + $0x18] sm:$0xff]
    %v401 = vld [vmem:[#allocation8 + $0x20] sm:$0xff]
    %v402 = vld [vmem:[#allocation8 + $0x28] sm:$0xff]
    %v403 = vld [vmem:[#allocation8 + $0x30] sm:$0xff]
    %v404 = vld [vmem:[#allocation8 + $0x38] sm:$0xff]
    %v405 = vld [vmem:[#allocation8 + $0x40] sm:$0xff]
    %v406 = vld [vmem:[#allocation8 + $0x48] sm:$0xff]
    %v407 = vld [vmem:[#allocation8 + $0x50] sm:$0xff]
    %v408 = vld [vmem:[#allocation8 + $0x58] sm:$0xff]
    %v409 = vld [vmem:[#allocation8 + $0x60] sm:$0xff]
    %v410 = vld [vmem:[#allocation8 + $0x68] sm:$0xff]
    %v411 = vld [vmem:[#allocation8 + $0x70] sm:$0xff]
    %v412 = vld [vmem:[#allocation8 + $0x78] sm:$0xff]
    %v413 = vld [vmem:[#allocation8 + $0x80] sm:$0xff]
    %v414 = vld [vmem:[#allocation8 + $0x88] sm:$0xff]
    %v415 = vld [vmem:[#allocation8 + $0x90] sm:$0xff]
    %v416 = vld [vmem:[#allocation8 + $0x98] sm:$0xff]
    %v417 = vld [vmem:[#allocation8 + $0xa0] sm:$0xff]
    %v418 = vld [vmem:[#allocation8 + $0xa8] sm:$0xff]
    %v419 = vld [vmem:[#allocation8 + $0xb0] sm:$0xff]
    %v420 = vld [vmem:[#allocation8 + $0xb8] sm:$0xff]
    %v421 = vld [vmem:[#allocation8 + $0xc0] sm:$0xff]
    %v422 = vld [vmem:[#allocation8 + $0xc8] sm:$0xff]
    %v423 = vld [vmem:[#allocation8 + $0xd0] sm:$0xff]
    %v424 = vld [vmem:[#allocation8 + $0xd8] sm:$0xff]
    %v425 = vld [vmem:[#allocation8 + $0xe0] sm:$0xff]
    %v426 = vld [vmem:[#allocation8 + $0xe8] sm:$0xff]
    %v427 = vld [vmem:[#allocation8 + $0xf0] sm:$0xff]
    %v428 = vld [vmem:[#allocation8 + $0xf8] sm:$0xff]
    %s429 = smul.u32 0, 4
    %s430 = smul.addr %s429, 8
    %s431 = scalar_lea.vmem [#allocation2], %s430
    %v432 = vld [vmem:[%s431] sm:$0xff]
    %v433 = vld [vmem:[%s431 + $0x8] sm:$0xff]
    %v434 = vld [vmem:[%s431 + $0x10] sm:$0xff]
    %v435 = vld [vmem:[%s431 + $0x18] sm:$0xff]
    %v468 = vunpack.c.l.b16 %v397
    %v469 = vunpack.c.h.b16 %v397
    %v470 = vunpack.c.l.b16 %v398
    %v471 = vunpack.c.h.b16 %v398
    %v472 = vunpack.c.l.b16 %v399
    %v473 = vunpack.c.h.b16 %v399
    %v474 = vunpack.c.l.b16 %v400
    %v475 = vunpack.c.h.b16 %v400
    %v476 = vunpack.c.l.b16 %v401
    %v477 = vunpack.c.h.b16 %v401
    %v478 = vunpack.c.l.b16 %v402
    %v479 = vunpack.c.h.b16 %v402
    %v480 = vunpack.c.l.b16 %v403
    %v481 = vunpack.c.h.b16 %v403
    %v482 = vunpack.c.l.b16 %v404
    %v483 = vunpack.c.h.b16 %v404
    %v484 = vunpack.c.l.b16 %v405
    %v485 = vunpack.c.h.b16 %v405
    %v486 = vunpack.c.l.b16 %v406
    %v487 = vunpack.c.h.b16 %v406
    %v488 = vunpack.c.l.b16 %v407
    %v489 = vunpack.c.h.b16 %v407
    %v490 = vunpack.c.l.b16 %v408
    %v491 = vunpack.c.h.b16 %v408
    %v492 = vunpack.c.l.b16 %v409
    %v493 = vunpack.c.h.b16 %v409
    %v494 = vunpack.c.l.b16 %v410
    %v495 = vunpack.c.h.b16 %v410
    %v496 = vunpack.c.l.b16 %v411
    %v497 = vunpack.c.h.b16 %v411
    %v498 = vunpack.c.l.b16 %v412
    %v499 = vunpack.c.h.b16 %v412
    %v500 = vunpack.c.l.b16 %v413
    %v501 = vunpack.c.h.b16 %v413
    %v502 = vunpack.c.l.b16 %v414
    %v503 = vunpack.c.h.b16 %v414
    %v504 = vunpack.c.l.b16 %v415
    %v505 = vunpack.c.h.b16 %v415
    %v506 = vunpack.c.l.b16 %v416
    %v507 = vunpack.c.h.b16 %v416
    %v508 = vunpack.c.l.b16 %v417
    %v509 = vunpack.c.h.b16 %v417
    %v510 = vunpack.c.l.b16 %v418
    %v511 = vunpack.c.h.b16 %v418
    %v512 = vunpack.c.l.b16 %v419
    %v513 = vunpack.c.h.b16 %v419
    %v514 = vunpack.c.l.b16 %v420
    %v515 = vunpack.c.h.b16 %v420
    %v516 = vunpack.c.l.b16 %v421
    %v517 = vunpack.c.h.b16 %v421
    %v518 = vunpack.c.l.b16 %v422
    %v519 = vunpack.c.h.b16 %v422
    %v520 = vunpack.c.l.b16 %v423
    %v521 = vunpack.c.h.b16 %v423
    %v522 = vunpack.c.l.b16 %v424
    %v523 = vunpack.c.h.b16 %v424
    %v524 = vunpack.c.l.b16 %v425
    %v525 = vunpack.c.h.b16 %v425
    %v526 = vunpack.c.l.b16 %v426
    %v527 = vunpack.c.h.b16 %v426
    %v528 = vunpack.c.l.b16 %v427
    %v529 = vunpack.c.h.b16 %v427
    %v530 = vunpack.c.l.b16 %v428
    %v531 = vunpack.c.h.b16 %v428
    %v532 = vpack.c.b16 %v472, %v468
    %v533 = vpack.c.b16 %v473, %v469
    %v534 = vpack.c.b16 %v474, %v470
    %v535 = vpack.c.b16 %v475, %v471
    %v536 = vpack.c.b16 %v480, %v476
    %v537 = vpack.c.b16 %v481, %v477
    %v538 = vpack.c.b16 %v482, %v478
    %v539 = vpack.c.b16 %v483, %v479
    %v540 = vpack.c.b16 %v488, %v484
    %v541 = vpack.c.b16 %v489, %v485
    %v542 = vpack.c.b16 %v490, %v486
    %v543 = vpack.c.b16 %v491, %v487
    %v544 = vpack.c.b16 %v496, %v492
    %v545 = vpack.c.b16 %v497, %v493
    %v546 = vpack.c.b16 %v498, %v494
    %v547 = vpack.c.b16 %v499, %v495
    %v548 = vpack.c.b16 %v504, %v500
    %v549 = vpack.c.b16 %v505, %v501
    %v550 = vpack.c.b16 %v506, %v502
    %v551 = vpack.c.b16 %v507, %v503
    %v552 = vpack.c.b16 %v512, %v508
    %v553 = vpack.c.b16 %v513, %v509
    %v554 = vpack.c.b16 %v514, %v510
    %v555 = vpack.c.b16 %v515, %v511
    %v556 = vpack.c.b16 %v520, %v516
    %v557 = vpack.c.b16 %v521, %v517
    %v558 = vpack.c.b16 %v522, %v518
    %v559 = vpack.c.b16 %v523, %v519
    %v560 = vpack.c.b16 %v528, %v524
    %v561 = vpack.c.b16 %v529, %v525
    %v562 = vpack.c.b16 %v530, %v526
    %v563 = vpack.c.b16 %v531, %v527
    %596 = vmatprep.subr.bf16.mxu0 %v561
    %597 = vmatpush1.bf16.msra.mxu0 %v560
    %598 = vmatprep.subr.bf16.mxu0 %v557
    %599 = vmatpush1.bf16.msra.mxu0 %v556
    %600 = vmatprep.subr.bf16.mxu0 %v553
    %601 = vmatpush1.bf16.msra.mxu0 %v552
    %602 = vmatprep.subr.bf16.mxu0 %v549
    %603 = vmatpush1.bf16.msra.mxu0 %v548
    %604 = vmatprep.subr.bf16.mxu0 %v545
    %605 = vmatpush1.bf16.msra.mxu0 %v544
    %606 = vmatprep.subr.bf16.mxu0 %v541
    %607 = vmatpush1.bf16.msra.mxu0 %v540
    %608 = vmatprep.subr.bf16.mxu0 %v537
    %609 = vmatpush1.bf16.msra.mxu0 %v536
    %610 = vmatprep.subr.bf16.mxu0 %v533
    %611 = vmatpush1.bf16.msra.mxu0 %v532
    %612 = vmatprep.subr.bf16.mxu0 0
    %613 = vmatpush2.bf16.msra.mxu0 0
    %614 = vmatprep.subr.bf16.mxu0 0
    %615 = vmatpush2.bf16.msra.mxu0 0
    %616 = vmatprep.subr.bf16.mxu0 0
    %617 = vmatpush2.bf16.msra.mxu0 0
    %618 = vmatprep.subr.bf16.mxu0 0
    %619 = vmatpush2.bf16.msra.mxu0 0
    %620 = vmatprep.subr.bf16.mxu0 0
    %621 = vmatpush2.bf16.msra.mxu0 0
    %622 = vmatprep.subr.bf16.mxu0 0
    %623 = vmatpush2.bf16.msra.mxu0 0
    %624 = vmatprep.subr.bf16.mxu0 0
    %625 = vmatpush2.bf16.msra.mxu0 0
    %626 = vmatprep.subr.bf16.mxu0 0
    %627 = vmatpush2.bf16.msra.mxu0 0
    %628 = vmatprep.mubr.bf16.mxu0 0
    %629 = vmatmul.mubr.bf16.gmra.mxu0 0
    %v630 = vpop.f32.mrf.mxu0
    %v631 = vadd.f32 %v432, %v630
    %v632 = vpop.f32.mrf.mxu0
    %v633 = vadd.f32 %v433, %v632
    %v634 = vpop.f32.mrf.mxu0
    %v635 = vpop.f32.mrf.mxu0
    %636 = vdwg.mxu0
    %637 = vmatprep.subr.bf16.mxu0 %v563
    %638 = vmatpush1.bf16.msra.mxu0 %v562
    %639 = vmatprep.subr.bf16.mxu0 %v559
    %640 = vmatpush1.bf16.msra.mxu0 %v558
    %641 = vmatprep.subr.bf16.mxu0 %v555
    %642 = vmatpush1.bf16.msra.mxu0 %v554
    %643 = vmatprep.subr.bf16.mxu0 %v551
    %644 = vmatpush1.bf16.msra.mxu0 %v550
    %645 = vmatprep.subr.bf16.mxu0 %v547
    %646 = vmatpush1.bf16.msra.mxu0 %v546
    %647 = vmatprep.subr.bf16.mxu0 %v543
    %648 = vmatpush1.bf16.msra.mxu0 %v542
    %649 = vmatprep.subr.bf16.mxu0 %v539
    %650 = vmatpush1.bf16.msra.mxu0 %v538
    %651 = vmatprep.subr.bf16.mxu0 %v535
    %652 = vmatpush1.bf16.msra.mxu0 %v534
    %653 = vmatprep.subr.bf16.mxu0 0
    %654 = vmatpush2.bf16.msra.mxu0 0
    %655 = vmatprep.subr.bf16.mxu0 0
    %656 = vmatpush2.bf16.msra.mxu0 0
    %657 = vmatprep.subr.bf16.mxu0 0
    %658 = vmatpush2.bf16.msra.mxu0 0
    %659 = vmatprep.subr.bf16.mxu0 0
    %660 = vmatpush2.bf16.msra.mxu0 0
    %661 = vmatprep.subr.bf16.mxu0 0
    %662 = vmatpush2.bf16.msra.mxu0 0
    %663 = vmatprep.subr.bf16.mxu0 0
    %664 = vmatpush2.bf16.msra.mxu0 0
    %665 = vmatprep.subr.bf16.mxu0 0
    %666 = vmatpush2.bf16.msra.mxu0 0
    %667 = vmatprep.subr.bf16.mxu0 0
    %668 = vmatpush2.bf16.msra.mxu0 0
    %669 = vmatprep.mubr.bf16.mxu0 0
    %670 = vmatmul.mubr.bf16.gmra.mxu0 0
    %v671 = vpop.f32.mrf.mxu0
    %v672 = vadd.f32 %v434, %v671
    %v673 = vpop.f32.mrf.mxu0
    %v674 = vadd.f32 %v435, %v673
    %v675 = vpop.f32.mrf.mxu0
    %v676 = vpop.f32.mrf.mxu0
    %677 = vdwg.mxu0
    %v678 = vxor.u32 %v631, 2147483648
    %v679 = vxor.u32 %v633, 2147483648
    %v680 = vxor.u32 %v672, 2147483648
    %v681 = vmul.f32 %v678, 1.442695
    %v682 = vpow.pop %v681
    %v683 = vmul.f32 %v679, 1.442695
    %v684 = vpow.pop %v683
    %v685 = vmul.f32 %v680, 1.442695
    %v686 = vpow.pop %v685
    %v687 = vadd.f32 %v682, 1.0
    %v688 = vadd.f32 %v684, 1.0
    %v689 = vadd.f32 %v686, 1.0
    %v690 = vrcp.pop %v687
    %v691 = vmul.f32 1.0, %v690
    %v692 = vrcp.pop %v688
    %v693 = vmul.f32 1.0, %v692
    %v694 = vrcp.pop %v689
    %v695 = vmul.f32 1.0, %v694
    %v696 = vtanh.pop %v674
    %v697 = vmul.f32 %v693, 0.0
    %v698 = vmul.f32 %v691, %v696
    %v699 = vadd.f32 %v697, %v698
    %v700 = vtanh.pop %v699
    %v701 = vmul.f32 %v695, %v700
    %v702 = vpack.c.bf16 %v701, %v701
    %s703 = smul.u32 1, 4
    %s704 = smul.addr %s703, 8
    %s705 = scalar_lea.vmem [#allocation2], %s704
    %v706 = vld [vmem:[%s705] sm:$0xff]
    %v707 = vld [vmem:[%s705 + $0x8] sm:$0xff]
    %v708 = vld [vmem:[%s705 + $0x10] sm:$0xff]
    %v709 = vld [vmem:[%s705 + $0x18] sm:$0xff]
    %710 = vmatprep.subr.bf16.mxu0 %v561
    %711 = vmatpush1.bf16.msra.mxu0 %v560
    %712 = vmatprep.subr.bf16.mxu0 %v557
    %713 = vmatpush1.bf16.msra.mxu0 %v556
    %714 = vmatprep.subr.bf16.mxu0 %v553
    %715 = vmatpush1.bf16.msra.mxu0 %v552
    %716 = vmatprep.subr.bf16.mxu0 %v549
    %717 = vmatpush1.bf16.msra.mxu0 %v548
    %718 = vmatprep.subr.bf16.mxu0 %v545
    %719 = vmatpush1.bf16.msra.mxu0 %v544
    %720 = vmatprep.subr.bf16.mxu0 %v541
    %721 = vmatpush1.bf16.msra.mxu0 %v540
    %722 = vmatprep.subr.bf16.mxu0 %v537
    %723 = vmatpush1.bf16.msra.mxu0 %v536
    %724 = vmatprep.subr.bf16.mxu0 %v533
    %725 = vmatpush1.bf16.msra.mxu0 %v532
    %726 = vmatprep.subr.bf16.mxu0 0
    %727 = vmatpush2.bf16.msra.mxu0 0
    %728 = vmatprep.subr.bf16.mxu0 0
    %729 = vmatpush2.bf16.msra.mxu0 0
    %730 = vmatprep.subr.bf16.mxu0 0
    %731 = vmatpush2.bf16.msra.mxu0 0
    %732 = vmatprep.subr.bf16.mxu0 0
    %733 = vmatpush2.bf16.msra.mxu0 0
    %734 = vmatprep.subr.bf16.mxu0 0
    %735 = vmatpush2.bf16.msra.mxu0 0
    %736 = vmatprep.subr.bf16.mxu0 0
    %737 = vmatpush2.bf16.msra.mxu0 0
    %738 = vmatprep.subr.bf16.mxu0 0
    %739 = vmatpush2.bf16.msra.mxu0 0
    %740 = vmatprep.subr.bf16.mxu0 0
    %741 = vmatpush2.bf16.msra.mxu0 0
    %742 = vmatprep.mubr.bf16.mxu0 0
    %743 = vmatmul.mubr.bf16.gmra.mxu0 %v702
    %v744 = vpop.f32.mrf.mxu0
    %v745 = vadd.f32 %v706, %v744
    %v746 = vpop.f32.mrf.mxu0
    %v747 = vadd.f32 %v707, %v746
    %v748 = vpop.f32.mrf.mxu0
    %v749 = vpop.f32.mrf.mxu0
    %750 = vdwg.mxu0
    %751 = vmatprep.subr.bf16.mxu0 %v563
    %752 = vmatpush1.bf16.msra.mxu0 %v562
    %753 = vmatprep.subr.bf16.mxu0 %v559
    %754 = vmatpush1.bf16.msra.mxu0 %v558
    %755 = vmatprep.subr.bf16.mxu0 %v555
    %756 = vmatpush1.bf16.msra.mxu0 %v554
    %757 = vmatprep.subr.bf16.mxu0 %v551
    %758 = vmatpush1.bf16.msra.mxu0 %v550
    %759 = vmatprep.subr.bf16.mxu0 %v547
    %760 = vmatpush1.bf16.msra.mxu0 %v546
    %761 = vmatprep.subr.bf16.mxu0 %v543
    %762 = vmatpush1.bf16.msra.mxu0 %v542
    %763 = vmatprep.subr.bf16.mxu0 %v539
    %764 = vmatpush1.bf16.msra.mxu0 %v538
    %765 = vmatprep.subr.bf16.mxu0 %v535
    %766 = vmatpush1.bf16.msra.mxu0 %v534
    %767 = vmatprep.subr.bf16.mxu0 0
    %768 = vmatpush2.bf16.msra.mxu0 0
    %769 = vmatprep.subr.bf16.mxu0 0
    %770 = vmatpush2.bf16.msra.mxu0 0
    %771 = vmatprep.subr.bf16.mxu0 0
    %772 = vmatpush2.bf16.msra.mxu0 0
    %773 = vmatprep.subr.bf16.mxu0 0
    %774 = vmatpush2.bf16.msra.mxu0 0
    %775 = vmatprep.subr.bf16.mxu0 0
    %776 = vmatpush2.bf16.msra.mxu0 0
    %777 = vmatprep.subr.bf16.mxu0 0
    %778 = vmatpush2.bf16.msra.mxu0 0
    %779 = vmatprep.subr.bf16.mxu0 0
    %780 = vmatpush2.bf16.msra.mxu0 0
    %781 = vmatprep.subr.bf16.mxu0 0
    %782 = vmatpush2.bf16.msra.mxu0 0
    %783 = vmatprep.mubr.bf16.mxu0 0
    %784 = vmatmul.mubr.bf16.gmra.mxu0 %v702
    %v785 = vpop.f32.mrf.mxu0
    %v786 = vadd.f32 %v708, %v785
    %v787 = vpop.f32.mrf.mxu0
    %v788 = vadd.f32 %v709, %v787
    %v789 = vpop.f32.mrf.mxu0
    %v790 = vpop.f32.mrf.mxu0
    %791 = vdwg.mxu0
    %v792 = vxor.u32 %v745, 2147483648
    %v793 = vxor.u32 %v747, 2147483648
    %v794 = vxor.u32 %v786, 2147483648
    %v795 = vmul.f32 %v792, 1.442695
    %v796 = vpow.pop %v795
    %v797 = vmul.f32 %v793, 1.442695
    %v798 = vpow.pop %v797
    %v799 = vmul.f32 %v794, 1.442695
    %v800 = vpow.pop %v799
    %v801 = vadd.f32 %v796, 1.0
    %v802 = vadd.f32 %v798, 1.0
    %v803 = vadd.f32 %v800, 1.0
    %v804 = vrcp.pop %v801
    %v805 = vmul.f32 1.0, %v804
    %v806 = vrcp.pop %v802
    %v807 = vmul.f32 1.0, %v806
    %v808 = vrcp.pop %v803
    %v809 = vmul.f32 1.0, %v808
    %v810 = vtanh.pop %v788
    %v811 = vmul.f32 %v807, %v699
    %v812 = vmul.f32 %v805, %v810
    %v813 = vadd.f32 %v811, %v812
    %v814 = vtanh.pop %v813
    %v815 = vmul.f32 %v809, %v814
    %v816 = vpack.c.bf16 %v815, %v815
    %s817 = smul.u32 2, 4
    %s818 = smul.addr %s817, 8
    %s819 = scalar_lea.vmem [#allocation2], %s818
    %v820 = vld [vmem:[%s819] sm:$0xff]
    %v821 = vld [vmem:[%s819 + $0x8] sm:$0xff]
    %v822 = vld [vmem:[%s819 + $0x10] sm:$0xff]
    %v823 = vld [vmem:[%s819 + $0x18] sm:$0xff]
    %824 = vmatprep.subr.bf16.mxu0 %v561
    %825 = vmatpush1.bf16.msra.mxu0 %v560
    %826 = vmatprep.subr.bf16.mxu0 %v557
    %827 = vmatpush1.bf16.msra.mxu0 %v556
    %828 = vmatprep.subr.bf16.mxu0 %v553
    %829 = vmatpush1.bf16.msra.mxu0 %v552
    %830 = vmatprep.subr.bf16.mxu0 %v549
    %831 = vmatpush1.bf16.msra.mxu0 %v548
    %832 = vmatprep.subr.bf16.mxu0 %v545
    %833 = vmatpush1.bf16.msra.mxu0 %v544
    %834 = vmatprep.subr.bf16.mxu0 %v541
    %835 = vmatpush1.bf16.msra.mxu0 %v540
    %836 = vmatprep.subr.bf16.mxu0 %v537
    %837 = vmatpush1.bf16.msra.mxu0 %v536
    %838 = vmatprep.subr.bf16.mxu0 %v533
    %839 = vmatpush1.bf16.msra.mxu0 %v532
    %840 = vmatprep.subr.bf16.mxu0 0
    %841 = vmatpush2.bf16.msra.mxu0 0
    %842 = vmatprep.subr.bf16.mxu0 0
    %843 = vmatpush2.bf16.msra.mxu0 0
    %844 = vmatprep.subr.bf16.mxu0 0
    %845 = vmatpush2.bf16.msra.mxu0 0
    %846 = vmatprep.subr.bf16.mxu0 0
    %847 = vmatpush2.bf16.msra.mxu0 0
    %848 = vmatprep.subr.bf16.mxu0 0
    %849 = vmatpush2.bf16.msra.mxu0 0
    %850 = vmatprep.subr.bf16.mxu0 0
    %851 = vmatpush2.bf16.msra.mxu0 0
    %852 = vmatprep.subr.bf16.mxu0 0
    %853 = vmatpush2.bf16.msra.mxu0 0
    %854 = vmatprep.subr.bf16.mxu0 0
    %855 = vmatpush2.bf16.msra.mxu0 0
    %856 = vmatprep.mubr.bf16.mxu0 0
    %857 = vmatmul.mubr.bf16.gmra.mxu0 %v816
    %v858 = vpop.f32.mrf.mxu0
    %v859 = vadd.f32 %v820, %v858
    %v860 = vpop.f32.mrf.mxu0
    %v861 = vadd.f32 %v821, %v860
    %v862 = vpop.f32.mrf.mxu0
    %v863 = vpop.f32.mrf.mxu0
    %864 = vdwg.mxu0
    %865 = vmatprep.subr.bf16.mxu0 %v563
    %866 = vmatpush1.bf16.msra.mxu0 %v562
    %867 = vmatprep.subr.bf16.mxu0 %v559
    %868 = vmatpush1.bf16.msra.mxu0 %v558
    %869 = vmatprep.subr.bf16.mxu0 %v555
    %870 = vmatpush1.bf16.msra.mxu0 %v554
    %871 = vmatprep.subr.bf16.mxu0 %v551
    %872 = vmatpush1.bf16.msra.mxu0 %v550
    %873 = vmatprep.subr.bf16.mxu0 %v547
    %874 = vmatpush1.bf16.msra.mxu0 %v546
    %875 = vmatprep.subr.bf16.mxu0 %v543
    %876 = vmatpush1.bf16.msra.mxu0 %v542
    %877 = vmatprep.subr.bf16.mxu0 %v539
    %878 = vmatpush1.bf16.msra.mxu0 %v538
    %879 = vmatprep.subr.bf16.mxu0 %v535
    %880 = vmatpush1.bf16.msra.mxu0 %v534
    %881 = vmatprep.subr.bf16.mxu0 0
    %882 = vmatpush2.bf16.msra.mxu0 0
    %883 = vmatprep.subr.bf16.mxu0 0
    %884 = vmatpush2.bf16.msra.mxu0 0
    %885 = vmatprep.subr.bf16.mxu0 0
    %886 = vmatpush2.bf16.msra.mxu0 0
    %887 = vmatprep.subr.bf16.mxu0 0
    %888 = vmatpush2.bf16.msra.mxu0 0
    %889 = vmatprep.subr.bf16.mxu0 0
    %890 = vmatpush2.bf16.msra.mxu0 0
    %891 = vmatprep.subr.bf16.mxu0 0
    %892 = vmatpush2.bf16.msra.mxu0 0
    %893 = vmatprep.subr.bf16.mxu0 0
    %894 = vmatpush2.bf16.msra.mxu0 0
    %895 = vmatprep.subr.bf16.mxu0 0
    %896 = vmatpush2.bf16.msra.mxu0 0
    %897 = vmatprep.mubr.bf16.mxu0 0
    %898 = vmatmul.mubr.bf16.gmra.mxu0 %v816
    %v899 = vpop.f32.mrf.mxu0
    %v900 = vadd.f32 %v822, %v899
    %v901 = vpop.f32.mrf.mxu0
    %v902 = vadd.f32 %v823, %v901
    %v903 = vpop.f32.mrf.mxu0
    %v904 = vpop.f32.mrf.mxu0
    %905 = vdwg.mxu0
    %v906 = vxor.u32 %v859, 2147483648
    %v907 = vxor.u32 %v861, 2147483648
    %v908 = vxor.u32 %v900, 2147483648
    %v909 = vmul.f32 %v906, 1.442695
    %v910 = vpow.pop %v909
    %v911 = vmul.f32 %v907, 1.442695
    %v912 = vpow.pop %v911
    %v913 = vmul.f32 %v908, 1.442695
    %v914 = vpow.pop %v913
    %v915 = vadd.f32 %v910, 1.0
    %v916 = vadd.f32 %v912, 1.0
    %v917 = vadd.f32 %v914, 1.0
    %v918 = vrcp.pop %v915
    %v919 = vmul.f32 1.0, %v918
    %v920 = vrcp.pop %v916
    %v921 = vmul.f32 1.0, %v920
    %v922 = vrcp.pop %v917
    %v923 = vmul.f32 1.0, %v922
    %v924 = vtanh.pop %v902
    %v925 = vmul.f32 %v921, %v813
    %v926 = vmul.f32 %v919, %v924
    %v927 = vadd.f32 %v925, %v926
    %v928 = vtanh.pop %v927
    %v929 = vmul.f32 %v923, %v928
    %v930 = vpack.c.bf16 %v929, %v929
    %s931 = smul.u32 3, 4
    %s932 = smul.addr %s931, 8
    %s933 = scalar_lea.vmem [#allocation2], %s932
    %v934 = vld [vmem:[%s933] sm:$0xff]
    %v935 = vld [vmem:[%s933 + $0x8] sm:$0xff]
    %v936 = vld [vmem:[%s933 + $0x10] sm:$0xff]
    %v937 = vld [vmem:[%s933 + $0x18] sm:$0xff]
    %938 = vmatprep.subr.bf16.mxu0 %v561
    %939 = vmatpush1.bf16.msra.mxu0 %v560
    %940 = vmatprep.subr.bf16.mxu0 %v557
    %941 = vmatpush1.bf16.msra.mxu0 %v556
    %942 = vmatprep.subr.bf16.mxu0 %v553
    %943 = vmatpush1.bf16.msra.mxu0 %v552
    %944 = vmatprep.subr.bf16.mxu0 %v549
    %945 = vmatpush1.bf16.msra.mxu0 %v548
    %946 = vmatprep.subr.bf16.mxu0 %v545
    %947 = vmatpush1.bf16.msra.mxu0 %v544
    %948 = vmatprep.subr.bf16.mxu0 %v541
    %949 = vmatpush1.bf16.msra.mxu0 %v540
    %950 = vmatprep.subr.bf16.mxu0 %v537
    %951 = vmatpush1.bf16.msra.mxu0 %v536
    %952 = vmatprep.subr.bf16.mxu0 %v533
    %953 = vmatpush1.bf16.msra.mxu0 %v532
    %954 = vmatprep.subr.bf16.mxu0 0
    %955 = vmatpush2.bf16.msra.mxu0 0
    %956 = vmatprep.subr.bf16.mxu0 0
    %957 = vmatpush2.bf16.msra.mxu0 0
    %958 = vmatprep.subr.bf16.mxu0 0
    %959 = vmatpush2.bf16.msra.mxu0 0
    %960 = vmatprep.subr.bf16.mxu0 0
    %961 = vmatpush2.bf16.msra.mxu0 0
    %962 = vmatprep.subr.bf16.mxu0 0
    %963 = vmatpush2.bf16.msra.mxu0 0
    %964 = vmatprep.subr.bf16.mxu0 0
    %965 = vmatpush2.bf16.msra.mxu0 0
    %966 = vmatprep.subr.bf16.mxu0 0
    %967 = vmatpush2.bf16.msra.mxu0 0
    %968 = vmatprep.subr.bf16.mxu0 0
    %969 = vmatpush2.bf16.msra.mxu0 0
    %970 = vmatprep.mubr.bf16.mxu0 0
    %971 = vmatmul.mubr.bf16.gmra.mxu0 %v930
    %v972 = vpop.f32.mrf.mxu0
    %v973 = vadd.f32 %v934, %v972
    %v974 = vpop.f32.mrf.mxu0
    %v975 = vadd.f32 %v935, %v974
    %v976 = vpop.f32.mrf.mxu0
    %v977 = vpop.f32.mrf.mxu0
    %978 = vdwg.mxu0
    %979 = vmatprep.subr.bf16.mxu0 %v563
    %980 = vmatpush1.bf16.msra.mxu0 %v562
    %981 = vmatprep.subr.bf16.mxu0 %v559
    %982 = vmatpush1.bf16.msra.mxu0 %v558
    %983 = vmatprep.subr.bf16.mxu0 %v555
    %984 = vmatpush1.bf16.msra.mxu0 %v554
    %985 = vmatprep.subr.bf16.mxu0 %v551
    %986 = vmatpush1.bf16.msra.mxu0 %v550
    %987 = vmatprep.subr.bf16.mxu0 %v547
    %988 = vmatpush1.bf16.msra.mxu0 %v546
    %989 = vmatprep.subr.bf16.mxu0 %v543
    %990 = vmatpush1.bf16.msra.mxu0 %v542
    %991 = vmatprep.subr.bf16.mxu0 %v539
    %992 = vmatpush1.bf16.msra.mxu0 %v538
    %993 = vmatprep.subr.bf16.mxu0 %v535
    %994 = vmatpush1.bf16.msra.mxu0 %v534
    %995 = vmatprep.subr.bf16.mxu0 0
    %996 = vmatpush2.bf16.msra.mxu0 0
    %997 = vmatprep.subr.bf16.mxu0 0
    %998 = vmatpush2.bf16.msra.mxu0 0
    %999 = vmatprep.subr.bf16.mxu0 0
    %1000 = vmatpush2.bf16.msra.mxu0 0
    %1001 = vmatprep.subr.bf16.mxu0 0
    %1002 = vmatpush2.bf16.msra.mxu0 0
    %1003 = vmatprep.subr.bf16.mxu0 0
    %1004 = vmatpush2.bf16.msra.mxu0 0
    %1005 = vmatprep.subr.bf16.mxu0 0
    %1006 = vmatpush2.bf16.msra.mxu0 0
    %1007 = vmatprep.subr.bf16.mxu0 0
    %1008 = vmatpush2.bf16.msra.mxu0 0
    %1009 = vmatprep.subr.bf16.mxu0 0
    %1010 = vmatpush2.bf16.msra.mxu0 0
    %1011 = vmatprep.mubr.bf16.mxu0 0
    %1012 = vmatmul.mubr.bf16.gmra.mxu0 %v930
    %v1013 = vpop.f32.mrf.mxu0
    %v1014 = vadd.f32 %v936, %v1013
    %v1015 = vpop.f32.mrf.mxu0
    %v1016 = vadd.f32 %v937, %v1015
    %v1017 = vpop.f32.mrf.mxu0
    %v1018 = vpop.f32.mrf.mxu0
    %1019 = vdwg.mxu0
    %v1020 = vxor.u32 %v973, 2147483648
    %v1021 = vxor.u32 %v975, 2147483648
    %v1022 = vxor.u32 %v1014, 2147483648
    %v1023 = vmul.f32 %v1020, 1.442695
    %v1024 = vpow.pop %v1023
    %v1025 = vmul.f32 %v1021, 1.442695
    %v1026 = vpow.pop %v1025
    %v1027 = vmul.f32 %v1022, 1.442695
    %v1028 = vpow.pop %v1027
    %v1029 = vadd.f32 %v1024, 1.0
    %v1030 = vadd.f32 %v1026, 1.0
    %v1031 = vadd.f32 %v1028, 1.0
    %v1032 = vrcp.pop %v1029
    %v1033 = vmul.f32 1.0, %v1032
    %v1034 = vrcp.pop %v1030
    %v1035 = vmul.f32 1.0, %v1034
    %v1036 = vrcp.pop %v1031
    %v1037 = vmul.f32 1.0, %v1036
    %v1038 = vtanh.pop %v1016
    %v1039 = vmul.f32 %v1035, %v927
    %v1040 = vmul.f32 %v1033, %v1038
    %v1041 = vadd.f32 %v1039, %v1040
    %v1042 = vtanh.pop %v1041
    %v1043 = vmul.f32 %v1037, %v1042
    %v1044 = vpack.c.bf16 %v1043, %v1043
    %s1045 = smul.u32 4, 4
    %s1046 = smul.addr %s1045, 8
    %s1047 = scalar_lea.vmem [#allocation2], %s1046
    %v1048 = vld [vmem:[%s1047] sm:$0xff]
    %v1049 = vld [vmem:[%s1047 + $0x8] sm:$0xff]
    %v1050 = vld [vmem:[%s1047 + $0x10] sm:$0xff]
    %v1051 = vld [vmem:[%s1047 + $0x18] sm:$0xff]
    %1052 = vmatprep.subr.bf16.mxu0 %v561
    %1053 = vmatpush1.bf16.msra.mxu0 %v560
    %1054 = vmatprep.subr.bf16.mxu0 %v557
    %1055 = vmatpush1.bf16.msra.mxu0 %v556
    %1056 = vmatprep.subr.bf16.mxu0 %v553
    %1057 = vmatpush1.bf16.msra.mxu0 %v552
    %1058 = vmatprep.subr.bf16.mxu0 %v549
    %1059 = vmatpush1.bf16.msra.mxu0 %v548
    %1060 = vmatprep.subr.bf16.mxu0 %v545
    %1061 = vmatpush1.bf16.msra.mxu0 %v544
    %1062 = vmatprep.subr.bf16.mxu0 %v541
    %1063 = vmatpush1.bf16.msra.mxu0 %v540
    %1064 = vmatprep.subr.bf16.mxu0 %v537
    %1065 = vmatpush1.bf16.msra.mxu0 %v536
    %1066 = vmatprep.subr.bf16.mxu0 %v533
    %1067 = vmatpush1.bf16.msra.mxu0 %v532
    %1068 = vmatprep.subr.bf16.mxu0 0
    %1069 = vmatpush2.bf16.msra.mxu0 0
    %1070 = vmatprep.subr.bf16.mxu0 0
    %1071 = vmatpush2.bf16.msra.mxu0 0
    %1072 = vmatprep.subr.bf16.mxu0 0
    %1073 = vmatpush2.bf16.msra.mxu0 0
    %1074 = vmatprep.subr.bf16.mxu0 0
    %1075 = vmatpush2.bf16.msra.mxu0 0
    %1076 = vmatprep.subr.bf16.mxu0 0
    %1077 = vmatpush2.bf16.msra.mxu0 0
    %1078 = vmatprep.subr.bf16.mxu0 0
    %1079 = vmatpush2.bf16.msra.mxu0 0
    %1080 = vmatprep.subr.bf16.mxu0 0
    %1081 = vmatpush2.bf16.msra.mxu0 0
    %1082 = vmatprep.subr.bf16.mxu0 0
    %1083 = vmatpush2.bf16.msra.mxu0 0
    %1084 = vmatprep.mubr.bf16.mxu0 0
    %1085 = vmatmul.mubr.bf16.gmra.mxu0 %v1044
    %v1086 = vpop.f32.mrf.mxu0
    %v1087 = vadd.f32 %v1048, %v1086
    %v1088 = vpop.f32.mrf.mxu0
    %v1089 = vadd.f32 %v1049, %v1088
    %v1090 = vpop.f32.mrf.mxu0
    %v1091 = vpop.f32.mrf.mxu0
    %1092 = vdwg.mxu0
    %1093 = vmatprep.subr.bf16.mxu0 %v563
    %1094 = vmatpush1.bf16.msra.mxu0 %v562
    %1095 = vmatprep.subr.bf16.mxu0 %v559
    %1096 = vmatpush1.bf16.msra.mxu0 %v558
    %1097 = vmatprep.subr.bf16.mxu0 %v555
    %1098 = vmatpush1.bf16.msra.mxu0 %v554
    %1099 = vmatprep.subr.bf16.mxu0 %v551
    %1100 = vmatpush1.bf16.msra.mxu0 %v550
    %1101 = vmatprep.subr.bf16.mxu0 %v547
    %1102 = vmatpush1.bf16.msra.mxu0 %v546
    %1103 = vmatprep.subr.bf16.mxu0 %v543
    %1104 = vmatpush1.bf16.msra.mxu0 %v542
    %1105 = vmatprep.subr.bf16.mxu0 %v539
    %1106 = vmatpush1.bf16.msra.mxu0 %v538
    %1107 = vmatprep.subr.bf16.mxu0 %v535
    %1108 = vmatpush1.bf16.msra.mxu0 %v534
    %1109 = vmatprep.subr.bf16.mxu0 0
    %1110 = vmatpush2.bf16.msra.mxu0 0
    %1111 = vmatprep.subr.bf16.mxu0 0
    %1112 = vmatpush2.bf16.msra.mxu0 0
    %1113 = vmatprep.subr.bf16.mxu0 0
    %1114 = vmatpush2.bf16.msra.mxu0 0
    %1115 = vmatprep.subr.bf16.mxu0 0
    %1116 = vmatpush2.bf16.msra.mxu0 0
    %1117 = vmatprep.subr.bf16.mxu0 0
    %1118 = vmatpush2.bf16.msra.mxu0 0
    %1119 = vmatprep.subr.bf16.mxu0 0
    %1120 = vmatpush2.bf16.msra.mxu0 0
    %1121 = vmatprep.subr.bf16.mxu0 0
    %1122 = vmatpush2.bf16.msra.mxu0 0
    %1123 = vmatprep.subr.bf16.mxu0 0
    %1124 = vmatpush2.bf16.msra.mxu0 0
    %1125 = vmatprep.mubr.bf16.mxu0 0
    %1126 = vmatmul.mubr.bf16.gmra.mxu0 %v1044
    %v1127 = vpop.f32.mrf.mxu0
    %v1128 = vadd.f32 %v1050, %v1127
    %v1129 = vpop.f32.mrf.mxu0
    %v1130 = vadd.f32 %v1051, %v1129
    %v1131 = vpop.f32.mrf.mxu0
    %v1132 = vpop.f32.mrf.mxu0
    %1133 = vdwg.mxu0
    %v1134 = vxor.u32 %v1087, 2147483648
    %v1135 = vxor.u32 %v1089, 2147483648
    %v1136 = vxor.u32 %v1128, 2147483648
    %v1137 = vmul.f32 %v1134, 1.442695
    %v1138 = vpow.pop %v1137
    %v1139 = vmul.f32 %v1135, 1.442695
    %v1140 = vpow.pop %v1139
    %v1141 = vmul.f32 %v1136, 1.442695
    %v1142 = vpow.pop %v1141
    %v1143 = vadd.f32 %v1138, 1.0
    %v1144 = vadd.f32 %v1140, 1.0
    %v1145 = vadd.f32 %v1142, 1.0
    %v1146 = vrcp.pop %v1143
    %v1147 = vmul.f32 1.0, %v1146
    %v1148 = vrcp.pop %v1144
    %v1149 = vmul.f32 1.0, %v1148
    %v1150 = vrcp.pop %v1145
    %v1151 = vmul.f32 1.0, %v1150
    %v1152 = vtanh.pop %v1130
    %v1153 = vmul.f32 %v1149, %v1041
    %v1154 = vmul.f32 %v1147, %v1152
    %v1155 = vadd.f32 %v1153, %v1154
    %v1156 = vtanh.pop %v1155
    %v1157 = vmul.f32 %v1151, %v1156
    %v1158 = vpack.c.bf16 %v1157, %v1157
    %s1159 = smul.u32 5, 4
    %s1160 = smul.addr %s1159, 8
    %s1161 = scalar_lea.vmem [#allocation2], %s1160
    %v1162 = vld [vmem:[%s1161] sm:$0xff]
    %v1163 = vld [vmem:[%s1161 + $0x8] sm:$0xff]
    %v1164 = vld [vmem:[%s1161 + $0x10] sm:$0xff]
    %v1165 = vld [vmem:[%s1161 + $0x18] sm:$0xff]
    %1166 = vmatprep.subr.bf16.mxu0 %v561
    %1167 = vmatpush1.bf16.msra.mxu0 %v560
    %1168 = vmatprep.subr.bf16.mxu0 %v557
    %1169 = vmatpush1.bf16.msra.mxu0 %v556
    %1170 = vmatprep.subr.bf16.mxu0 %v553
    %1171 = vmatpush1.bf16.msra.mxu0 %v552
    %1172 = vmatprep.subr.bf16.mxu0 %v549
    %1173 = vmatpush1.bf16.msra.mxu0 %v548
    %1174 = vmatprep.subr.bf16.mxu0 %v545
    %1175 = vmatpush1.bf16.msra.mxu0 %v544
    %1176 = vmatprep.subr.bf16.mxu0 %v541
    %1177 = vmatpush1.bf16.msra.mxu0 %v540
    %1178 = vmatprep.subr.bf16.mxu0 %v537
    %1179 = vmatpush1.bf16.msra.mxu0 %v536
    %1180 = vmatprep.subr.bf16.mxu0 %v533
    %1181 = vmatpush1.bf16.msra.mxu0 %v532
    %1182 = vmatprep.subr.bf16.mxu0 0
    %1183 = vmatpush2.bf16.msra.mxu0 0
    %1184 = vmatprep.subr.bf16.mxu0 0
    %1185 = vmatpush2.bf16.msra.mxu0 0
    %1186 = vmatprep.subr.bf16.mxu0 0
    %1187 = vmatpush2.bf16.msra.mxu0 0
    %1188 = vmatprep.subr.bf16.mxu0 0
    %1189 = vmatpush2.bf16.msra.mxu0 0
    %1190 = vmatprep.subr.bf16.mxu0 0
    %1191 = vmatpush2.bf16.msra.mxu0 0
    %1192 = vmatprep.subr.bf16.mxu0 0
    %1193 = vmatpush2.bf16.msra.mxu0 0
    %1194 = vmatprep.subr.bf16.mxu0 0
    %1195 = vmatpush2.bf16.msra.mxu0 0
    %1196 = vmatprep.subr.bf16.mxu0 0
    %1197 = vmatpush2.bf16.msra.mxu0 0
    %1198 = vmatprep.mubr.bf16.mxu0 0
    %1199 = vmatmul.mubr.bf16.gmra.mxu0 %v1158
    %v1200 = vpop.f32.mrf.mxu0
    %v1201 = vadd.f32 %v1162, %v1200
    %v1202 = vpop.f32.mrf.mxu0
    %v1203 = vadd.f32 %v1163, %v1202
    %v1204 = vpop.f32.mrf.mxu0
    %v1205 = vpop.f32.mrf.mxu0
    %1206 = vdwg.mxu0
    %1207 = vmatprep.subr.bf16.mxu0 %v563
    %1208 = vmatpush1.bf16.msra.mxu0 %v562
    %1209 = vmatprep.subr.bf16.mxu0 %v559
    %1210 = vmatpush1.bf16.msra.mxu0 %v558
    %1211 = vmatprep.subr.bf16.mxu0 %v555
    %1212 = vmatpush1.bf16.msra.mxu0 %v554
    %1213 = vmatprep.subr.bf16.mxu0 %v551
    %1214 = vmatpush1.bf16.msra.mxu0 %v550
    %1215 = vmatprep.subr.bf16.mxu0 %v547
    %1216 = vmatpush1.bf16.msra.mxu0 %v546
    %1217 = vmatprep.subr.bf16.mxu0 %v543
    %1218 = vmatpush1.bf16.msra.mxu0 %v542
    %1219 = vmatprep.subr.bf16.mxu0 %v539
    %1220 = vmatpush1.bf16.msra.mxu0 %v538
    %1221 = vmatprep.subr.bf16.mxu0 %v535
    %1222 = vmatpush1.bf16.msra.mxu0 %v534
    %1223 = vmatprep.subr.bf16.mxu0 0
    %1224 = vmatpush2.bf16.msra.mxu0 0
    %1225 = vmatprep.subr.bf16.mxu0 0
    %1226 = vmatpush2.bf16.msra.mxu0 0
    %1227 = vmatprep.subr.bf16.mxu0 0
    %1228 = vmatpush2.bf16.msra.mxu0 0
    %1229 = vmatprep.subr.bf16.mxu0 0
    %1230 = vmatpush2.bf16.msra.mxu0 0
    %1231 = vmatprep.subr.bf16.mxu0 0
    %1232 = vmatpush2.bf16.msra.mxu0 0
    %1233 = vmatprep.subr.bf16.mxu0 0
    %1234 = vmatpush2.bf16.msra.mxu0 0
    %1235 = vmatprep.subr.bf16.mxu0 0
    %1236 = vmatpush2.bf16.msra.mxu0 0
    %1237 = vmatprep.subr.bf16.mxu0 0
    %1238 = vmatpush2.bf16.msra.mxu0 0
    %1239 = vmatprep.mubr.bf16.mxu0 0
    %1240 = vmatmul.mubr.bf16.gmra.mxu0 %v1158
    %v1241 = vpop.f32.mrf.mxu0
    %v1242 = vadd.f32 %v1164, %v1241
    %v1243 = vpop.f32.mrf.mxu0
    %v1244 = vadd.f32 %v1165, %v1243
    %v1245 = vpop.f32.mrf.mxu0
    %v1246 = vpop.f32.mrf.mxu0
    %1247 = vdwg.mxu0
    %v1248 = vxor.u32 %v1201, 2147483648
    %v1249 = vxor.u32 %v1203, 2147483648
    %v1250 = vxor.u32 %v1242, 2147483648
    %v1251 = vmul.f32 %v1248, 1.442695
    %v1252 = vpow.pop %v1251
    %v1253 = vmul.f32 %v1249, 1.442695
    %v1254 = vpow.pop %v1253
    %v1255 = vmul.f32 %v1250, 1.442695
    %v1256 = vpow.pop %v1255
    %v1257 = vadd.f32 %v1252, 1.0
    %v1258 = vadd.f32 %v1254, 1.0
    %v1259 = vadd.f32 %v1256, 1.0
    %v1260 = vrcp.pop %v1257
    %v1261 = vmul.f32 1.0, %v1260
    %v1262 = vrcp.pop %v1258
    %v1263 = vmul.f32 1.0, %v1262
    %v1264 = vrcp.pop %v1259
    %v1265 = vmul.f32 1.0, %v1264
    %v1266 = vtanh.pop %v1244
    %v1267 = vmul.f32 %v1263, %v1155
    %v1268 = vmul.f32 %v1261, %v1266
    %v1269 = vadd.f32 %v1267, %v1268
    %v1270 = vtanh.pop %v1269
    %v1271 = vmul.f32 %v1265, %v1270
    %v1272 = vpack.c.bf16 %v1271, %v1271
    %s1273 = smul.u32 6, 4
    %s1274 = smul.addr %s1273, 8
    %s1275 = scalar_lea.vmem [#allocation2], %s1274
    %v1276 = vld [vmem:[%s1275] sm:$0xff]
    %v1277 = vld [vmem:[%s1275 + $0x8] sm:$0xff]
    %v1278 = vld [vmem:[%s1275 + $0x10] sm:$0xff]
    %v1279 = vld [vmem:[%s1275 + $0x18] sm:$0xff]
    %1280 = vmatprep.subr.bf16.mxu0 %v561
    %1281 = vmatpush1.bf16.msra.mxu0 %v560
    %1282 = vmatprep.subr.bf16.mxu0 %v557
    %1283 = vmatpush1.bf16.msra.mxu0 %v556
    %1284 = vmatprep.subr.bf16.mxu0 %v553
    %1285 = vmatpush1.bf16.msra.mxu0 %v552
    %1286 = vmatprep.subr.bf16.mxu0 %v549
    %1287 = vmatpush1.bf16.msra.mxu0 %v548
    %1288 = vmatprep.subr.bf16.mxu0 %v545
    %1289 = vmatpush1.bf16.msra.mxu0 %v544
    %1290 = vmatprep.subr.bf16.mxu0 %v541
    %1291 = vmatpush1.bf16.msra.mxu0 %v540
    %1292 = vmatprep.subr.bf16.mxu0 %v537
    %1293 = vmatpush1.bf16.msra.mxu0 %v536
    %1294 = vmatprep.subr.bf16.mxu0 %v533
    %1295 = vmatpush1.bf16.msra.mxu0 %v532
    %1296 = vmatprep.subr.bf16.mxu0 0
    %1297 = vmatpush2.bf16.msra.mxu0 0
    %1298 = vmatprep.subr.bf16.mxu0 0
    %1299 = vmatpush2.bf16.msra.mxu0 0
    %1300 = vmatprep.subr.bf16.mxu0 0
    %1301 = vmatpush2.bf16.msra.mxu0 0
    %1302 = vmatprep.subr.bf16.mxu0 0
    %1303 = vmatpush2.bf16.msra.mxu0 0
    %1304 = vmatprep.subr.bf16.mxu0 0
    %1305 = vmatpush2.bf16.msra.mxu0 0
    %1306 = vmatprep.subr.bf16.mxu0 0
    %1307 = vmatpush2.bf16.msra.mxu0 0
    %1308 = vmatprep.subr.bf16.mxu0 0
    %1309 = vmatpush2.bf16.msra.mxu0 0
    %1310 = vmatprep.subr.bf16.mxu0 0
    %1311 = vmatpush2.bf16.msra.mxu0 0
    %1312 = vmatprep.mubr.bf16.mxu0 0
    %1313 = vmatmul.mubr.bf16.gmra.mxu0 %v1272
    %v1314 = vpop.f32.mrf.mxu0
    %v1315 = vadd.f32 %v1276, %v1314
    %v1316 = vpop.f32.mrf.mxu0
    %v1317 = vadd.f32 %v1277, %v1316
    %v1318 = vpop.f32.mrf.mxu0
    %v1319 = vpop.f32.mrf.mxu0
    %1320 = vdwg.mxu0
    %1321 = vmatprep.subr.bf16.mxu0 %v563
    %1322 = vmatpush1.bf16.msra.mxu0 %v562
    %1323 = vmatprep.subr.bf16.mxu0 %v559
    %1324 = vmatpush1.bf16.msra.mxu0 %v558
    %1325 = vmatprep.subr.bf16.mxu0 %v555
    %1326 = vmatpush1.bf16.msra.mxu0 %v554
    %1327 = vmatprep.subr.bf16.mxu0 %v551
    %1328 = vmatpush1.bf16.msra.mxu0 %v550
    %1329 = vmatprep.subr.bf16.mxu0 %v547
    %1330 = vmatpush1.bf16.msra.mxu0 %v546
    %1331 = vmatprep.subr.bf16.mxu0 %v543
    %1332 = vmatpush1.bf16.msra.mxu0 %v542
    %1333 = vmatprep.subr.bf16.mxu0 %v539
    %1334 = vmatpush1.bf16.msra.mxu0 %v538
    %1335 = vmatprep.subr.bf16.mxu0 %v535
    %1336 = vmatpush1.bf16.msra.mxu0 %v534
    %1337 = vmatprep.subr.bf16.mxu0 0
    %1338 = vmatpush2.bf16.msra.mxu0 0
    %1339 = vmatprep.subr.bf16.mxu0 0
    %1340 = vmatpush2.bf16.msra.mxu0 0
    %1341 = vmatprep.subr.bf16.mxu0 0
    %1342 = vmatpush2.bf16.msra.mxu0 0
    %1343 = vmatprep.subr.bf16.mxu0 0
    %1344 = vmatpush2.bf16.msra.mxu0 0
    %1345 = vmatprep.subr.bf16.mxu0 0
    %1346 = vmatpush2.bf16.msra.mxu0 0
    %1347 = vmatprep.subr.bf16.mxu0 0
    %1348 = vmatpush2.bf16.msra.mxu0 0
    %1349 = vmatprep.subr.bf16.mxu0 0
    %1350 = vmatpush2.bf16.msra.mxu0 0
    %1351 = vmatprep.subr.bf16.mxu0 0
    %1352 = vmatpush2.bf16.msra.mxu0 0
    %1353 = vmatprep.mubr.bf16.mxu0 0
    %1354 = vmatmul.mubr.bf16.gmra.mxu0 %v1272
    %v1355 = vpop.f32.mrf.mxu0
    %v1356 = vadd.f32 %v1278, %v1355
    %v1357 = vpop.f32.mrf.mxu0
    %v1358 = vadd.f32 %v1279, %v1357
    %v1359 = vpop.f32.mrf.mxu0
    %v1360 = vpop.f32.mrf.mxu0
    %1361 = vdwg.mxu0
    %v1362 = vxor.u32 %v1315, 2147483648
    %v1363 = vxor.u32 %v1317, 2147483648
    %v1364 = vxor.u32 %v1356, 2147483648
    %v1365 = vmul.f32 %v1362, 1.442695
    %v1366 = vpow.pop %v1365
    %v1367 = vmul.f32 %v1363, 1.442695
    %v1368 = vpow.pop %v1367
    %v1369 = vmul.f32 %v1364, 1.442695
    %v1370 = vpow.pop %v1369
    %v1371 = vadd.f32 %v1366, 1.0
    %v1372 = vadd.f32 %v1368, 1.0
    %v1373 = vadd.f32 %v1370, 1.0
    %v1374 = vrcp.pop %v1371
    %v1375 = vmul.f32 1.0, %v1374
    %v1376 = vrcp.pop %v1372
    %v1377 = vmul.f32 1.0, %v1376
    %v1378 = vrcp.pop %v1373
    %v1379 = vmul.f32 1.0, %v1378
    %v1380 = vtanh.pop %v1358
    %v1381 = vmul.f32 %v1377, %v1269
    %v1382 = vmul.f32 %v1375, %v1380
    %v1383 = vadd.f32 %v1381, %v1382
    %v1384 = vtanh.pop %v1383
    %v1385 = vmul.f32 %v1379, %v1384
    %v1386 = vpack.c.bf16 %v1385, %v1385
    %s1387 = smul.u32 7, 4
    %s1388 = smul.addr %s1387, 8
    %s1389 = scalar_lea.vmem [#allocation2], %s1388
    %v1390 = vld [vmem:[%s1389] sm:$0xff]
    %v1391 = vld [vmem:[%s1389 + $0x8] sm:$0xff]
    %v1392 = vld [vmem:[%s1389 + $0x10] sm:$0xff]
    %v1393 = vld [vmem:[%s1389 + $0x18] sm:$0xff]
    %1394 = vmatprep.subr.bf16.mxu0 %v561
    %1395 = vmatpush1.bf16.msra.mxu0 %v560
    %1396 = vmatprep.subr.bf16.mxu0 %v557
    %1397 = vmatpush1.bf16.msra.mxu0 %v556
    %1398 = vmatprep.subr.bf16.mxu0 %v553
    %1399 = vmatpush1.bf16.msra.mxu0 %v552
    %1400 = vmatprep.subr.bf16.mxu0 %v549
    %1401 = vmatpush1.bf16.msra.mxu0 %v548
    %1402 = vmatprep.subr.bf16.mxu0 %v545
    %1403 = vmatpush1.bf16.msra.mxu0 %v544
    %1404 = vmatprep.subr.bf16.mxu0 %v541
    %1405 = vmatpush1.bf16.msra.mxu0 %v540
    %1406 = vmatprep.subr.bf16.mxu0 %v537
    %1407 = vmatpush1.bf16.msra.mxu0 %v536
    %1408 = vmatprep.subr.bf16.mxu0 %v533
    %1409 = vmatpush1.bf16.msra.mxu0 %v532
    %1410 = vmatprep.subr.bf16.mxu0 0
    %1411 = vmatpush2.bf16.msra.mxu0 0
    %1412 = vmatprep.subr.bf16.mxu0 0
    %1413 = vmatpush2.bf16.msra.mxu0 0
    %1414 = vmatprep.subr.bf16.mxu0 0
    %1415 = vmatpush2.bf16.msra.mxu0 0
    %1416 = vmatprep.subr.bf16.mxu0 0
    %1417 = vmatpush2.bf16.msra.mxu0 0
    %1418 = vmatprep.subr.bf16.mxu0 0
    %1419 = vmatpush2.bf16.msra.mxu0 0
    %1420 = vmatprep.subr.bf16.mxu0 0
    %1421 = vmatpush2.bf16.msra.mxu0 0
    %1422 = vmatprep.subr.bf16.mxu0 0
    %1423 = vmatpush2.bf16.msra.mxu0 0
    %1424 = vmatprep.subr.bf16.mxu0 0
    %1425 = vmatpush2.bf16.msra.mxu0 0
    %1426 = vmatprep.mubr.bf16.mxu0 0
    %1427 = vmatmul.mubr.bf16.gmra.mxu0 %v1386
    %v1428 = vpop.f32.mrf.mxu0
    %v1429 = vadd.f32 %v1390, %v1428
    %v1430 = vpop.f32.mrf.mxu0
    %v1431 = vadd.f32 %v1391, %v1430
    %v1432 = vpop.f32.mrf.mxu0
    %v1433 = vpop.f32.mrf.mxu0
    %1434 = vdwg.mxu0
    %1435 = vmatprep.subr.bf16.mxu0 %v563
    %1436 = vmatpush1.bf16.msra.mxu0 %v562
    %1437 = vmatprep.subr.bf16.mxu0 %v559
    %1438 = vmatpush1.bf16.msra.mxu0 %v558
    %1439 = vmatprep.subr.bf16.mxu0 %v555
    %1440 = vmatpush1.bf16.msra.mxu0 %v554
    %1441 = vmatprep.subr.bf16.mxu0 %v551
    %1442 = vmatpush1.bf16.msra.mxu0 %v550
    %1443 = vmatprep.subr.bf16.mxu0 %v547
    %1444 = vmatpush1.bf16.msra.mxu0 %v546
    %1445 = vmatprep.subr.bf16.mxu0 %v543
    %1446 = vmatpush1.bf16.msra.mxu0 %v542
    %1447 = vmatprep.subr.bf16.mxu0 %v539
    %1448 = vmatpush1.bf16.msra.mxu0 %v538
    %1449 = vmatprep.subr.bf16.mxu0 %v535
    %1450 = vmatpush1.bf16.msra.mxu0 %v534
    %1451 = vmatprep.subr.bf16.mxu0 0
    %1452 = vmatpush2.bf16.msra.mxu0 0
    %1453 = vmatprep.subr.bf16.mxu0 0
    %1454 = vmatpush2.bf16.msra.mxu0 0
    %1455 = vmatprep.subr.bf16.mxu0 0
    %1456 = vmatpush2.bf16.msra.mxu0 0
    %1457 = vmatprep.subr.bf16.mxu0 0
    %1458 = vmatpush2.bf16.msra.mxu0 0
    %1459 = vmatprep.subr.bf16.mxu0 0
    %1460 = vmatpush2.bf16.msra.mxu0 0
    %1461 = vmatprep.subr.bf16.mxu0 0
    %1462 = vmatpush2.bf16.msra.mxu0 0
    %1463 = vmatprep.subr.bf16.mxu0 0
    %1464 = vmatpush2.bf16.msra.mxu0 0
    %1465 = vmatprep.subr.bf16.mxu0 0
    %1466 = vmatpush2.bf16.msra.mxu0 0
    %1467 = vmatprep.mubr.bf16.mxu0 0
    %1468 = vmatmul.mubr.bf16.gmra.mxu0 %v1386
    %v1469 = vpop.f32.mrf.mxu0
    %v1470 = vadd.f32 %v1392, %v1469
    %v1471 = vpop.f32.mrf.mxu0
    %v1472 = vadd.f32 %v1393, %v1471
    %v1473 = vpop.f32.mrf.mxu0
    %v1474 = vpop.f32.mrf.mxu0
    %1475 = vdwg.mxu0
    %v1476 = vxor.u32 %v1429, 2147483648
    %v1477 = vxor.u32 %v1431, 2147483648
    %v1478 = vxor.u32 %v1470, 2147483648
    %v1479 = vmul.f32 %v1476, 1.442695
    %v1480 = vpow.pop %v1479
    %v1481 = vmul.f32 %v1477, 1.442695
    %v1482 = vpow.pop %v1481
    %v1483 = vmul.f32 %v1478, 1.442695
    %v1484 = vpow.pop %v1483
    %v1485 = vadd.f32 %v1480, 1.0
    %v1486 = vadd.f32 %v1482, 1.0
    %v1487 = vadd.f32 %v1484, 1.0
    %v1488 = vrcp.pop %v1485
    %v1489 = vmul.f32 1.0, %v1488
    %v1490 = vrcp.pop %v1486
    %v1491 = vmul.f32 1.0, %v1490
    %v1492 = vrcp.pop %v1487
    %v1493 = vmul.f32 1.0, %v1492
    %v1494 = vtanh.pop %v1472
    %v1495 = vmul.f32 %v1491, %v1383
    %v1496 = vmul.f32 %v1489, %v1494
    %v1497 = vadd.f32 %v1495, %v1496
    %v1498 = vtanh.pop %v1497
    %v1499 = vmul.f32 %v1493, %v1498
    %1500 = vst [vmem:[#allocation9] sm:$0xff] %v1499
    // Predicated region
    $region30: #{tpu_custom_call.1} parent=1 // pred_check
      _
    $region31: #{tpu_custom_call.1} parent=1 // pred_check_branch
      %1502 = sbr.rel (0) target = $region33
    $region32: #{tpu_custom_call.1} parent=1 // pred_region
      %s1504 = ssub.s32 128, 128
      %1505 = vsyncadd [#allocation5], %s1504
      %s1507 = sshll.u32 [#allocation9], 4
      %s1508 = int_to_ptr.vmem [resolvable:$true] %s1507
      %1510 = dma.vmem_to_hbm [thread:$0]  %s1508, 128, %s4, [#allocation5]
    $region33: #{tpu_custom_call.1} parent=1 // pred_fallthru
      _
    // Predicated region
    $region34: #{tpu_custom_call.1} parent=1 // pred_check
      _
    $region35: #{tpu_custom_call.1} parent=1 // pred_check_branch
      %1512 = sbr.rel (0) target = $region37
    $region36: #{tpu_custom_call.1} parent=1 // pred_region
      %1513 = dma.done [#allocation5], 128
    $region37: #{tpu_custom_call.1} parent=1 // pred_fallthru
      _
    %1514 = vsyncpa [#allocation4], 1
    %1515 = vsyncpa [#allocation7], 1
    %1516 = vsyncpa [#allocation5], 1

</llo_original>
